<compile_context>
chip_gen: v6e
topology: v6e:2x2x1
jax: 0.10.0
libtpu: 0.0.40
codegen_flags: <defaults>
</compile_context>

<pallas_src>
import functools
import math

import jax
import jax.numpy as jnp
from jax import lax
from jax.experimental import pallas as pl
from jax.experimental.pallas import tpu as pltpu


def _layer_norm(x, gamma, beta, eps=1e-5):
    mu = jnp.mean(x, axis=-1, keepdims=True)
    var = jnp.mean(jnp.square(x - mu), axis=-1, keepdims=True)
    return (x - mu) * lax.rsqrt(var + eps) * gamma + beta


def encoder_block_kernel(x_ref, mask_ref,
                         wq_ref, bq_ref, wk_ref, bk_ref, wv_ref, bv_ref,
                         wo_ref, bo_ref,
                         g1_ref, be1_ref,
                         w1_ref, b1_ref, w2_ref, b2_ref,
                         g2_ref, be2_ref,
                         out_ref,
                         *, n_heads, d_k, d_v):
    x = x_ref[0]        # (S, D) f32 -- full (8,128) vreg tile
    mask = mask_ref[0]  # (S, S) f32, 1.0 = attend, 0.0 = masked

    # ---- Multi-head self-attention (Q = K = V = x) ----
    q = jnp.dot(x, wq_ref[...], preferred_element_type=jnp.float32) + bq_ref[...]
    k = jnp.dot(x, wk_ref[...], preferred_element_type=jnp.float32) + bk_ref[...]
    v = jnp.dot(x, wv_ref[...], preferred_element_type=jnp.float32) + bv_ref[...]

    # Fold the 1/sqrt(d_k) scale into Q once (one (S,D) VPU pass instead of
    # one (S,S) pass per head), and build the additive mask bias once.
    q = q * (1.0 / math.sqrt(d_k))
    mask_bias = jnp.where(mask > 0.0, 0.0, -1e30)          # (S, S)

    ctx_heads = []
    for h in range(n_heads):                               # static unroll; n_heads small
        qh = q[:, h * d_k:(h + 1) * d_k]                   # (S, d_k)
        kh = k[:, h * d_k:(h + 1) * d_k]                   # (S, d_k)
        vh = v[:, h * d_v:(h + 1) * d_v]                   # (S, d_v)
        scores = lax.dot_general(qh, kh, (((1,), (1,)), ((), ())),
                                 preferred_element_type=jnp.float32)
        scores = scores + mask_bias
        m = jnp.max(scores, axis=-1, keepdims=True)
        e = jnp.exp(scores - m)                            # EUP
        attn = e / jnp.sum(e, axis=-1, keepdims=True)
        ctx_heads.append(jnp.dot(attn, vh, preferred_element_type=jnp.float32))
    ctx = jnp.concatenate(ctx_heads, axis=-1)              # (S, n_heads * d_v)

    attn_out = jnp.dot(ctx, wo_ref[...], preferred_element_type=jnp.float32) + bo_ref[...]
    # TODO(synk): dropout (p=0.0 default) is an inference no-op; not implemented in-kernel.

    y = _layer_norm(x + attn_out, g1_ref[...], be1_ref[...])

    # ---- Position-wise feed-forward ----
    h1 = jnp.maximum(
        jnp.dot(y, w1_ref[...], preferred_element_type=jnp.float32) + b1_ref[...], 0.0)
    f = jnp.dot(h1, w2_ref[...], preferred_element_type=jnp.float32) + b2_ref[...]

    z = _layer_norm(y + f, g2_ref[...], be2_ref[...])
    out_ref[0] = z.astype(out_ref.dtype)


def encoder_block_forward(x, pad_mask, params, *, n_heads, d_k, d_v):
    """Pallas equivalent of EncoderBlock.forward(inputs, pad_mask)."""
    B, S, D = x.shape
    weight_order = ("wq", "bq", "wk", "bk", "wv", "bv", "wo", "bo",
                    "g1", "be1", "w1", "b1", "w2", "b2", "g2", "be2")
    weights = [params[name] for name in weight_order]

    def full_spec(a):
        # Full-array block, constant index -> DMA'd once, resident across grid steps.
        return pl.BlockSpec(a.shape, lambda b, _nd=a.ndim: (0,) * _nd)

    in_specs = [
        pl.BlockSpec((1, S, D), lambda b: (b, 0, 0)),   # per-batch activation tile
        pl.BlockSpec((1, S, S), lambda b: (b, 0, 0)),   # per-batch pad mask
    ] + [full_spec(w) for w in weights]

    out_specs = pl.BlockSpec((1, S, D), lambda b: (b, 0, 0))

    kernel = functools.partial(encoder_block_kernel,
                               n_heads=n_heads, d_k=d_k, d_v=d_v)

    return pl.pallas_call(
        kernel,
        out_shape=jax.ShapeDtypeStruct((B, S, D), jnp.float32),
        grid_spec=pltpu.PrefetchScalarGridSpec(
            num_scalar_prefetch=0,
            grid=(B,),
            in_specs=in_specs,
            out_specs=out_specs),
        compiler_params=pltpu.CompilerParams(
            dimension_semantics=("parallel",)),   # batch axis is independent (v7x: 2 TCs)
    )(x, pad_mask, *weights)


def encoder_block_ref(x, pad_mask, params, *, n_heads, d_k, d_v):
    """Pure-JAX reference of the same forward pass (HIGHEST precision)."""
    hp = lax.Precision.HIGHEST
    B, S, D = x.shape

    q = jnp.dot(x, params["wq"], precision=hp) + params["bq"]
    k = jnp.dot(x, params["wk"], precision=hp) + params["bk"]
    v = jnp.dot(x, params["wv"], precision=hp) + params["bv"]

    q = q.reshape(B, S, n_heads, d_k)
    k = k.reshape(B, S, n_heads, d_k)
    v = v.reshape(B, S, n_heads, d_v)

    scores = jnp.einsum("bqhd,bkhd->bhqk", q, k, precision=hp) / math.sqrt(d_k)
    scores = jnp.where(pad_mask[:, None, :, :] > 0.0, scores, -1e30)
    attn = jax.nn.softmax(scores, axis=-1)
    ctx = jnp.einsum("bhqk,bkhd->bqhd", attn, v, precision=hp).reshape(B, S, n_heads * d_v)

    attn_out = jnp.dot(ctx, params["wo"], precision=hp) + params["bo"]
    y = _layer_norm(x + attn_out, params["g1"], params["be1"])

    h1 = jnp.maximum(jnp.dot(y, params["w1"], precision=hp) + params["b1"], 0.0)
    f = jnp.dot(h1, params["w2"], precision=hp) + params["b2"]
    return _layer_norm(y + f, params["g2"], params["be2"])


if __name__ == "__main__":
    B, S = 2, 8
    d_model, d_k, d_v, n_heads, d_ff = 128, 32, 32, 4, 256

    key = jax.random.PRNGKey(0)
    keys = jax.random.split(key, 16)

    def w(k, shape, scale=0.02):
        return scale * jax.random.normal(k, shape, dtype=jnp.float32)

    params = {
        "wq": w(keys[0], (d_model, n_heads * d_k)),
        "bq": w(keys[1], (1, n_heads * d_k)),
        "wk": w(keys[2], (d_model, n_heads * d_k)),
        "bk": w(keys[3], (1, n_heads * d_k)),
        "wv": w(keys[4], (d_model, n_heads * d_v)),
        "bv": w(keys[5], (1, n_heads * d_v)),
        "wo": w(keys[6], (n_heads * d_v, d_model)),
        "bo": w(keys[7], (1, d_model)),
        "g1": jnp.ones((1, d_model), dtype=jnp.float32),
        "be1": jnp.zeros((1, d_model), dtype=jnp.float32),
        "w1": w(keys[8], (d_model, d_ff)),
        "b1": w(keys[9], (1, d_ff)),
        "w2": w(keys[10], (d_ff, d_model)),
        "b2": w(keys[11], (1, d_model)),
        "g2": jnp.ones((1, d_model), dtype=jnp.float32),
        "be2": jnp.zeros((1, d_model), dtype=jnp.float32),
    }

    x = jax.random.normal(keys[12], (B, S, d_model), dtype=jnp.float32)

    # Key-padding mask: batch 0 has all 8 tokens valid, batch 1 has last 2 padded.
    lengths = jnp.array([8, 6], dtype=jnp.int32)
    valid = (jnp.arange(S)[None, :] < lengths[:, None]).astype(jnp.float32)   # (B, S)
    pad_mask = jnp.broadcast_to(valid[:, None, :], (B, S, S)).astype(jnp.float32)

    out = encoder_block_forward(x, pad_mask, params,
                                n_heads=n_heads, d_k=d_k, d_v=d_v)
    out = jax.block_until_ready(out)

    ref = encoder_block_ref(x, pad_mask, params,
                            n_heads=n_heads, d_k=d_k, d_v=d_v)

    assert out.shape == (B, S, d_model), out.shape
    assert out.dtype == jnp.float32
    assert jnp.allclose(out, ref, atol=2e-2, rtol=2e-2), (
        "kernel output mismatch vs reference; max abs err = "
        f"{float(jnp.max(jnp.abs(out - ref)))}")

    print("KERNEL_OK")
</pallas_src>

<mosaic_0001>
module attributes {stable_mosaic.version = 11 : i64} {
  func.func @encoder_block_kernel(%arg0: i32, %arg1: memref<1x8x128xf32, #tpu.memory_space<vmem>>, %arg2: memref<1x8x8xf32, #tpu.memory_space<vmem>>, %arg3: memref<128x128xf32, #tpu.memory_space<vmem>>, %arg4: memref<1x128xf32, #tpu.memory_space<vmem>>, %arg5: memref<128x128xf32, #tpu.memory_space<vmem>>, %arg6: memref<1x128xf32, #tpu.memory_space<vmem>>, %arg7: memref<128x128xf32, #tpu.memory_space<vmem>>, %arg8: memref<1x128xf32, #tpu.memory_space<vmem>>, %arg9: memref<128x128xf32, #tpu.memory_space<vmem>>, %arg10: memref<1x128xf32, #tpu.memory_space<vmem>>, %arg11: memref<1x128xf32, #tpu.memory_space<vmem>>, %arg12: memref<1x128xf32, #tpu.memory_space<vmem>>, %arg13: memref<128x256xf32, #tpu.memory_space<vmem>>, %arg14: memref<1x256xf32, #tpu.memory_space<vmem>>, %arg15: memref<256x128xf32, #tpu.memory_space<vmem>>, %arg16: memref<1x128xf32, #tpu.memory_space<vmem>>, %arg17: memref<1x128xf32, #tpu.memory_space<vmem>>, %arg18: memref<1x128xf32, #tpu.memory_space<vmem>>, %arg19: memref<1x8x128xf32, #tpu.memory_space<vmem>>) attributes {dimension_semantics = [#tpu.dimension_semantics<parallel>], iteration_bounds = array<i64: 2>, scalar_prefetch = 0 : i64, scratch_operands = 0 : i64, tpu.core_type = #tpu.core_type<tc>, window_params = [{transform_indices = @transform_0, window_bounds = array<i64: 1, 8, 128>}, {transform_indices = @transform_1, window_bounds = array<i64: 1, 8, 8>}, {pipeline_mode = #tpu.pipeline_mode<synchronous>, transform_indices = @transform_2, window_bounds = array<i64: 128, 128>}, {pipeline_mode = #tpu.pipeline_mode<synchronous>, transform_indices = @transform_3, window_bounds = array<i64: 1, 128>}, {pipeline_mode = #tpu.pipeline_mode<synchronous>, transform_indices = @transform_4, window_bounds = array<i64: 128, 128>}, {pipeline_mode = #tpu.pipeline_mode<synchronous>, transform_indices = @transform_5, window_bounds = array<i64: 1, 128>}, {pipeline_mode = #tpu.pipeline_mode<synchronous>, transform_indices = @transform_6, window_bounds = array<i64: 128, 128>}, {pipeline_mode = #tpu.pipeline_mode<synchronous>, transform_indices = @transform_7, window_bounds = array<i64: 1, 128>}, {pipeline_mode = #tpu.pipeline_mode<synchronous>, transform_indices = @transform_8, window_bounds = array<i64: 128, 128>}, {pipeline_mode = #tpu.pipeline_mode<synchronous>, transform_indices = @transform_9, window_bounds = array<i64: 1, 128>}, {pipeline_mode = #tpu.pipeline_mode<synchronous>, transform_indices = @transform_10, window_bounds = array<i64: 1, 128>}, {pipeline_mode = #tpu.pipeline_mode<synchronous>, transform_indices = @transform_11, window_bounds = array<i64: 1, 128>}, {pipeline_mode = #tpu.pipeline_mode<synchronous>, transform_indices = @transform_12, window_bounds = array<i64: 128, 256>}, {pipeline_mode = #tpu.pipeline_mode<synchronous>, transform_indices = @transform_13, window_bounds = array<i64: 1, 256>}, {pipeline_mode = #tpu.pipeline_mode<synchronous>, transform_indices = @transform_14, window_bounds = array<i64: 256, 128>}, {pipeline_mode = #tpu.pipeline_mode<synchronous>, transform_indices = @transform_15, window_bounds = array<i64: 1, 128>}, {pipeline_mode = #tpu.pipeline_mode<synchronous>, transform_indices = @transform_16, window_bounds = array<i64: 1, 128>}, {pipeline_mode = #tpu.pipeline_mode<synchronous>, transform_indices = @transform_17, window_bounds = array<i64: 1, 128>}, {transform_indices = @transform_18, window_bounds = array<i64: 1, 8, 128>}]} {
    %c0 = arith.constant 0 : index
    %c0_0 = arith.constant 0 : index
    %c0_1 = arith.constant 0 : index
    %0 = vector.load %arg1[%c0, %c0_0, %c0_1] : memref<1x8x128xf32, #tpu.memory_space<vmem>>, vector<1x8x128xf32>
    %1 = vector.shape_cast %0 : vector<1x8x128xf32> to vector<8x128xf32>
    %c0_2 = arith.constant 0 : index
    %c0_3 = arith.constant 0 : index
    %c0_4 = arith.constant 0 : index
    %2 = vector.load %arg2[%c0_2, %c0_3, %c0_4] : memref<1x8x8xf32, #tpu.memory_space<vmem>>, vector<1x8x8xf32>
    %3 = vector.shape_cast %2 : vector<1x8x8xf32> to vector<8x8xf32>
    %c0_5 = arith.constant 0 : index
    %c0_6 = arith.constant 0 : index
    %4 = vector.load %arg3[%c0_5, %c0_6] : memref<128x128xf32, #tpu.memory_space<vmem>>, vector<128x128xf32>
    %cst = arith.constant dense<0.000000e+00> : vector<8x128xf32>
    %5 = tpu.matmul %1, %4, %cst {dimension_numbers = #tpu.dot_dimension_numbers<[1], [0], [0], [1], [0, 0, 1, 1], [], []>} : vector<8x128xf32>, vector<128x128xf32>, vector<8x128xf32> -> vector<8x128xf32>
    %c0_7 = arith.constant 0 : index
    %c0_8 = arith.constant 0 : index
    %6 = vector.load %arg4[%c0_7, %c0_8] : memref<1x128xf32, #tpu.memory_space<vmem>>, vector<1x128xf32>
    %7 = vector.broadcast %6 : vector<1x128xf32> to vector<8x128xf32>
    %8 = arith.addf %5, %7 : vector<8x128xf32>
    %c0_9 = arith.constant 0 : index
    %c0_10 = arith.constant 0 : index
    %9 = vector.load %arg5[%c0_9, %c0_10] : memref<128x128xf32, #tpu.memory_space<vmem>>, vector<128x128xf32>
    %cst_11 = arith.constant dense<0.000000e+00> : vector<8x128xf32>
    %10 = tpu.matmul %1, %9, %cst_11 {dimension_numbers = #tpu.dot_dimension_numbers<[1], [0], [0], [1], [0, 0, 1, 1], [], []>} : vector<8x128xf32>, vector<128x128xf32>, vector<8x128xf32> -> vector<8x128xf32>
    %c0_12 = arith.constant 0 : index
    %c0_13 = arith.constant 0 : index
    %11 = vector.load %arg6[%c0_12, %c0_13] : memref<1x128xf32, #tpu.memory_space<vmem>>, vector<1x128xf32>
    %12 = vector.broadcast %11 : vector<1x128xf32> to vector<8x128xf32>
    %13 = arith.addf %10, %12 : vector<8x128xf32>
    %c0_14 = arith.constant 0 : index
    %c0_15 = arith.constant 0 : index
    %14 = vector.load %arg7[%c0_14, %c0_15] : memref<128x128xf32, #tpu.memory_space<vmem>>, vector<128x128xf32>
    %cst_16 = arith.constant dense<0.000000e+00> : vector<8x128xf32>
    %15 = tpu.matmul %1, %14, %cst_16 {dimension_numbers = #tpu.dot_dimension_numbers<[1], [0], [0], [1], [0, 0, 1, 1], [], []>} : vector<8x128xf32>, vector<128x128xf32>, vector<8x128xf32> -> vector<8x128xf32>
    %c0_17 = arith.constant 0 : index
    %c0_18 = arith.constant 0 : index
    %16 = vector.load %arg8[%c0_17, %c0_18] : memref<1x128xf32, #tpu.memory_space<vmem>>, vector<1x128xf32>
    %17 = vector.broadcast %16 : vector<1x128xf32> to vector<8x128xf32>
    %18 = arith.addf %15, %17 : vector<8x128xf32>
    %cst_19 = arith.constant 0.176776692 : f32
    %19 = vector.broadcast %cst_19 : f32 to vector<8x128xf32>
    %20 = arith.mulf %8, %19 : vector<8x128xf32>
    %cst_20 = arith.constant 0.000000e+00 : f32
    %21 = vector.broadcast %cst_20 : f32 to vector<8x8xf32>
    %22 = arith.cmpf ogt, %3, %21 : vector<8x8xf32>
    %cst_21 = arith.constant 0.000000e+00 : f32
    %cst_22 = arith.constant -1.000000e+30 : f32
    %23 = vector.broadcast %cst_21 : f32 to vector<8x8xf32>
    %24 = vector.broadcast %cst_22 : f32 to vector<8x8xf32>
    %25 = arith.select %22, %23, %24 : vector<8x8xi1>, vector<8x8xf32>
    %26 = vector.extract_strided_slice %20 {offsets = [0, 0], sizes = [8, 32], strides = [1, 1]} : vector<8x128xf32> to vector<8x32xf32>
    %27 = vector.extract_strided_slice %13 {offsets = [0, 0], sizes = [8, 32], strides = [1, 1]} : vector<8x128xf32> to vector<8x32xf32>
    %28 = vector.extract_strided_slice %18 {offsets = [0, 0], sizes = [8, 32], strides = [1, 1]} : vector<8x128xf32> to vector<8x32xf32>
    %cst_23 = arith.constant dense<0.000000e+00> : vector<8x8xf32>
    %29 = tpu.matmul %26, %27, %cst_23 {dimension_numbers = #tpu.dot_dimension_numbers<[1], [1], [0], [0], [0, 0, 1, 0], [], []>} : vector<8x32xf32>, vector<8x32xf32>, vector<8x8xf32> -> vector<8x8xf32>
    %30 = arith.addf %29, %25 : vector<8x8xf32>
    %cst_24 = arith.constant dense<0xFF800000> : vector<8xf32>
    %31 = vector.multi_reduction <maximumf>, %30, %cst_24 [1] : vector<8x8xf32> to vector<8xf32>
    %32 = vector.shape_cast %31 : vector<8xf32> to vector<8x1xf32>
    %33 = vector.broadcast %32 : vector<8x1xf32> to vector<8x8xf32>
    %34 = arith.subf %30, %33 : vector<8x8xf32>
    %35 = math.exp %34 : vector<8x8xf32>
    %cst_25 = arith.constant dense<0.000000e+00> : vector<8xf32>
    %36 = vector.multi_reduction <add>, %35, %cst_25 [1] : vector<8x8xf32> to vector<8xf32>
    %37 = vector.shape_cast %36 : vector<8xf32> to vector<8x1xf32>
    %38 = vector.broadcast %37 : vector<8x1xf32> to vector<8x8xf32>
    %39 = arith.divf %35, %38 : vector<8x8xf32>
    %cst_26 = arith.constant dense<0.000000e+00> : vector<8x32xf32>
    %40 = tpu.matmul %39, %28, %cst_26 {dimension_numbers = #tpu.dot_dimension_numbers<[1], [0], [0], [1], [0, 0, 1, 1], [], []>} : vector<8x8xf32>, vector<8x32xf32>, vector<8x32xf32> -> vector<8x32xf32>
    %41 = vector.extract_strided_slice %20 {offsets = [0, 32], sizes = [8, 32], strides = [1, 1]} : vector<8x128xf32> to vector<8x32xf32>
    %42 = vector.extract_strided_slice %13 {offsets = [0, 32], sizes = [8, 32], strides = [1, 1]} : vector<8x128xf32> to vector<8x32xf32>
    %43 = vector.extract_strided_slice %18 {offsets = [0, 32], sizes = [8, 32], strides = [1, 1]} : vector<8x128xf32> to vector<8x32xf32>
    %cst_27 = arith.constant dense<0.000000e+00> : vector<8x8xf32>
    %44 = tpu.matmul %41, %42, %cst_27 {dimension_numbers = #tpu.dot_dimension_numbers<[1], [1], [0], [0], [0, 0, 1, 0], [], []>} : vector<8x32xf32>, vector<8x32xf32>, vector<8x8xf32> -> vector<8x8xf32>
    %45 = arith.addf %44, %25 : vector<8x8xf32>
    %cst_28 = arith.constant dense<0xFF800000> : vector<8xf32>
    %46 = vector.multi_reduction <maximumf>, %45, %cst_28 [1] : vector<8x8xf32> to vector<8xf32>
    %47 = vector.shape_cast %46 : vector<8xf32> to vector<8x1xf32>
    %48 = vector.broadcast %47 : vector<8x1xf32> to vector<8x8xf32>
    %49 = arith.subf %45, %48 : vector<8x8xf32>
    %50 = math.exp %49 : vector<8x8xf32>
    %cst_29 = arith.constant dense<0.000000e+00> : vector<8xf32>
    %51 = vector.multi_reduction <add>, %50, %cst_29 [1] : vector<8x8xf32> to vector<8xf32>
    %52 = vector.shape_cast %51 : vector<8xf32> to vector<8x1xf32>
    %53 = vector.broadcast %52 : vector<8x1xf32> to vector<8x8xf32>
    %54 = arith.divf %50, %53 : vector<8x8xf32>
    %cst_30 = arith.constant dense<0.000000e+00> : vector<8x32xf32>
    %55 = tpu.matmul %54, %43, %cst_30 {dimension_numbers = #tpu.dot_dimension_numbers<[1], [0], [0], [1], [0, 0, 1, 1], [], []>} : vector<8x8xf32>, vector<8x32xf32>, vector<8x32xf32> -> vector<8x32xf32>
    %56 = vector.extract_strided_slice %20 {offsets = [0, 64], sizes = [8, 32], strides = [1, 1]} : vector<8x128xf32> to vector<8x32xf32>
    %57 = vector.extract_strided_slice %13 {offsets = [0, 64], sizes = [8, 32], strides = [1, 1]} : vector<8x128xf32> to vector<8x32xf32>
    %58 = vector.extract_strided_slice %18 {offsets = [0, 64], sizes = [8, 32], strides = [1, 1]} : vector<8x128xf32> to vector<8x32xf32>
    %cst_31 = arith.constant dense<0.000000e+00> : vector<8x8xf32>
    %59 = tpu.matmul %56, %57, %cst_31 {dimension_numbers = #tpu.dot_dimension_numbers<[1], [1], [0], [0], [0, 0, 1, 0], [], []>} : vector<8x32xf32>, vector<8x32xf32>, vector<8x8xf32> -> vector<8x8xf32>
    %60 = arith.addf %59, %25 : vector<8x8xf32>
    %cst_32 = arith.constant dense<0xFF800000> : vector<8xf32>
    %61 = vector.multi_reduction <maximumf>, %60, %cst_32 [1] : vector<8x8xf32> to vector<8xf32>
    %62 = vector.shape_cast %61 : vector<8xf32> to vector<8x1xf32>
    %63 = vector.broadcast %62 : vector<8x1xf32> to vector<8x8xf32>
    %64 = arith.subf %60, %63 : vector<8x8xf32>
    %65 = math.exp %64 : vector<8x8xf32>
    %cst_33 = arith.constant dense<0.000000e+00> : vector<8xf32>
    %66 = vector.multi_reduction <add>, %65, %cst_33 [1] : vector<8x8xf32> to vector<8xf32>
    %67 = vector.shape_cast %66 : vector<8xf32> to vector<8x1xf32>
    %68 = vector.broadcast %67 : vector<8x1xf32> to vector<8x8xf32>
    %69 = arith.divf %65, %68 : vector<8x8xf32>
    %cst_34 = arith.constant dense<0.000000e+00> : vector<8x32xf32>
    %70 = tpu.matmul %69, %58, %cst_34 {dimension_numbers = #tpu.dot_dimension_numbers<[1], [0], [0], [1], [0, 0, 1, 1], [], []>} : vector<8x8xf32>, vector<8x32xf32>, vector<8x32xf32> -> vector<8x32xf32>
    %71 = vector.extract_strided_slice %20 {offsets = [0, 96], sizes = [8, 32], strides = [1, 1]} : vector<8x128xf32> to vector<8x32xf32>
    %72 = vector.extract_strided_slice %13 {offsets = [0, 96], sizes = [8, 32], strides = [1, 1]} : vector<8x128xf32> to vector<8x32xf32>
    %73 = vector.extract_strided_slice %18 {offsets = [0, 96], sizes = [8, 32], strides = [1, 1]} : vector<8x128xf32> to vector<8x32xf32>
    %cst_35 = arith.constant dense<0.000000e+00> : vector<8x8xf32>
    %74 = tpu.matmul %71, %72, %cst_35 {dimension_numbers = #tpu.dot_dimension_numbers<[1], [1], [0], [0], [0, 0, 1, 0], [], []>} : vector<8x32xf32>, vector<8x32xf32>, vector<8x8xf32> -> vector<8x8xf32>
    %75 = arith.addf %74, %25 : vector<8x8xf32>
    %cst_36 = arith.constant dense<0xFF800000> : vector<8xf32>
    %76 = vector.multi_reduction <maximumf>, %75, %cst_36 [1] : vector<8x8xf32> to vector<8xf32>
    %77 = vector.shape_cast %76 : vector<8xf32> to vector<8x1xf32>
    %78 = vector.broadcast %77 : vector<8x1xf32> to vector<8x8xf32>
    %79 = arith.subf %75, %78 : vector<8x8xf32>
    %80 = math.exp %79 : vector<8x8xf32>
    %cst_37 = arith.constant dense<0.000000e+00> : vector<8xf32>
    %81 = vector.multi_reduction <add>, %80, %cst_37 [1] : vector<8x8xf32> to vector<8xf32>
    %82 = vector.shape_cast %81 : vector<8xf32> to vector<8x1xf32>
    %83 = vector.broadcast %82 : vector<8x1xf32> to vector<8x8xf32>
    %84 = arith.divf %80, %83 : vector<8x8xf32>
    %cst_38 = arith.constant dense<0.000000e+00> : vector<8x32xf32>
    %85 = tpu.matmul %84, %73, %cst_38 {dimension_numbers = #tpu.dot_dimension_numbers<[1], [0], [0], [1], [0, 0, 1, 1], [], []>} : vector<8x8xf32>, vector<8x32xf32>, vector<8x32xf32> -> vector<8x32xf32>
    %86 = tpu.concatenate %40, %55, %70, %85 in 1 : vector<8x32xf32>, vector<8x32xf32>, vector<8x32xf32>, vector<8x32xf32> -> vector<8x128xf32>
    %c0_39 = arith.constant 0 : index
    %c0_40 = arith.constant 0 : index
    %87 = vector.load %arg9[%c0_39, %c0_40] : memref<128x128xf32, #tpu.memory_space<vmem>>, vector<128x128xf32>
    %cst_41 = arith.constant dense<0.000000e+00> : vector<8x128xf32>
    %88 = tpu.matmul %86, %87, %cst_41 {dimension_numbers = #tpu.dot_dimension_numbers<[1], [0], [0], [1], [0, 0, 1, 1], [], []>} : vector<8x128xf32>, vector<128x128xf32>, vector<8x128xf32> -> vector<8x128xf32>
    %c0_42 = arith.constant 0 : index
    %c0_43 = arith.constant 0 : index
    %89 = vector.load %arg10[%c0_42, %c0_43] : memref<1x128xf32, #tpu.memory_space<vmem>>, vector<1x128xf32>
    %90 = vector.broadcast %89 : vector<1x128xf32> to vector<8x128xf32>
    %91 = arith.addf %88, %90 : vector<8x128xf32>
    %92 = arith.addf %1, %91 : vector<8x128xf32>
    %c0_44 = arith.constant 0 : index
    %c0_45 = arith.constant 0 : index
    %93 = vector.load %arg11[%c0_44, %c0_45] : memref<1x128xf32, #tpu.memory_space<vmem>>, vector<1x128xf32>
    %c0_46 = arith.constant 0 : index
    %c0_47 = arith.constant 0 : index
    %94 = vector.load %arg12[%c0_46, %c0_47] : memref<1x128xf32, #tpu.memory_space<vmem>>, vector<1x128xf32>
    %cst_48 = arith.constant dense<0.000000e+00> : vector<8xf32>
    %95 = vector.multi_reduction <add>, %92, %cst_48 [1] : vector<8x128xf32> to vector<8xf32>
    %96 = vector.shape_cast %95 : vector<8xf32> to vector<8x1xf32>
    %cst_49 = arith.constant 1.280000e+02 : f32
    %97 = vector.broadcast %cst_49 : f32 to vector<8x1xf32>
    %98 = arith.divf %96, %97 : vector<8x1xf32>
    %99 = vector.broadcast %98 : vector<8x1xf32> to vector<8x128xf32>
    %100 = arith.subf %92, %99 : vector<8x128xf32>
    %101 = arith.mulf %100, %100 : vector<8x128xf32>
    %cst_50 = arith.constant dense<0.000000e+00> : vector<8xf32>
    %102 = vector.multi_reduction <add>, %101, %cst_50 [1] : vector<8x128xf32> to vector<8xf32>
    %103 = vector.shape_cast %102 : vector<8xf32> to vector<8x1xf32>
    %cst_51 = arith.constant 1.280000e+02 : f32
    %104 = vector.broadcast %cst_51 : f32 to vector<8x1xf32>
    %105 = arith.divf %103, %104 : vector<8x1xf32>
    %106 = vector.broadcast %98 : vector<8x1xf32> to vector<8x128xf32>
    %107 = arith.subf %92, %106 : vector<8x128xf32>
    %cst_52 = arith.constant 9.99999974E-6 : f32
    %108 = vector.broadcast %cst_52 : f32 to vector<8x1xf32>
    %109 = arith.addf %105, %108 : vector<8x1xf32>
    %110 = math.rsqrt %109 : vector<8x1xf32>
    %111 = vector.broadcast %110 : vector<8x1xf32> to vector<8x128xf32>
    %112 = arith.mulf %107, %111 : vector<8x128xf32>
    %113 = vector.broadcast %93 : vector<1x128xf32> to vector<8x128xf32>
    %114 = arith.mulf %112, %113 : vector<8x128xf32>
    %115 = vector.broadcast %94 : vector<1x128xf32> to vector<8x128xf32>
    %116 = arith.addf %114, %115 : vector<8x128xf32>
    %c0_53 = arith.constant 0 : index
    %c0_54 = arith.constant 0 : index
    %117 = vector.load %arg13[%c0_53, %c0_54] : memref<128x256xf32, #tpu.memory_space<vmem>>, vector<128x256xf32>
    %cst_55 = arith.constant dense<0.000000e+00> : vector<8x256xf32>
    %118 = tpu.matmul %116, %117, %cst_55 {dimension_numbers = #tpu.dot_dimension_numbers<[1], [0], [0], [1], [0, 0, 1, 1], [], []>} : vector<8x128xf32>, vector<128x256xf32>, vector<8x256xf32> -> vector<8x256xf32>
    %c0_56 = arith.constant 0 : index
    %c0_57 = arith.constant 0 : index
    %119 = vector.load %arg14[%c0_56, %c0_57] : memref<1x256xf32, #tpu.memory_space<vmem>>, vector<1x256xf32>
    %120 = vector.broadcast %119 : vector<1x256xf32> to vector<8x256xf32>
    %121 = arith.addf %118, %120 : vector<8x256xf32>
    %cst_58 = arith.constant 0.000000e+00 : f32
    %122 = vector.broadcast %cst_58 : f32 to vector<8x256xf32>
    %123 = arith.maximumf %121, %122 : vector<8x256xf32>
    %c0_59 = arith.constant 0 : index
    %c0_60 = arith.constant 0 : index
    %124 = vector.load %arg15[%c0_59, %c0_60] : memref<256x128xf32, #tpu.memory_space<vmem>>, vector<256x128xf32>
    %cst_61 = arith.constant dense<0.000000e+00> : vector<8x128xf32>
    %125 = tpu.matmul %123, %124, %cst_61 {dimension_numbers = #tpu.dot_dimension_numbers<[1], [0], [0], [1], [0, 0, 1, 1], [], []>} : vector<8x256xf32>, vector<256x128xf32>, vector<8x128xf32> -> vector<8x128xf32>
    %c0_62 = arith.constant 0 : index
    %c0_63 = arith.constant 0 : index
    %126 = vector.load %arg16[%c0_62, %c0_63] : memref<1x128xf32, #tpu.memory_space<vmem>>, vector<1x128xf32>
    %127 = vector.broadcast %126 : vector<1x128xf32> to vector<8x128xf32>
    %128 = arith.addf %125, %127 : vector<8x128xf32>
    %129 = arith.addf %116, %128 : vector<8x128xf32>
    %c0_64 = arith.constant 0 : index
    %c0_65 = arith.constant 0 : index
    %130 = vector.load %arg17[%c0_64, %c0_65] : memref<1x128xf32, #tpu.memory_space<vmem>>, vector<1x128xf32>
    %c0_66 = arith.constant 0 : index
    %c0_67 = arith.constant 0 : index
    %131 = vector.load %arg18[%c0_66, %c0_67] : memref<1x128xf32, #tpu.memory_space<vmem>>, vector<1x128xf32>
    %cst_68 = arith.constant dense<0.000000e+00> : vector<8xf32>
    %132 = vector.multi_reduction <add>, %129, %cst_68 [1] : vector<8x128xf32> to vector<8xf32>
    %133 = vector.shape_cast %132 : vector<8xf32> to vector<8x1xf32>
    %cst_69 = arith.constant 1.280000e+02 : f32
    %134 = vector.broadcast %cst_69 : f32 to vector<8x1xf32>
    %135 = arith.divf %133, %134 : vector<8x1xf32>
    %136 = vector.broadcast %135 : vector<8x1xf32> to vector<8x128xf32>
    %137 = arith.subf %129, %136 : vector<8x128xf32>
    %138 = arith.mulf %137, %137 : vector<8x128xf32>
    %cst_70 = arith.constant dense<0.000000e+00> : vector<8xf32>
    %139 = vector.multi_reduction <add>, %138, %cst_70 [1] : vector<8x128xf32> to vector<8xf32>
    %140 = vector.shape_cast %139 : vector<8xf32> to vector<8x1xf32>
    %cst_71 = arith.constant 1.280000e+02 : f32
    %141 = vector.broadcast %cst_71 : f32 to vector<8x1xf32>
    %142 = arith.divf %140, %141 : vector<8x1xf32>
    %143 = vector.broadcast %135 : vector<8x1xf32> to vector<8x128xf32>
    %144 = arith.subf %129, %143 : vector<8x128xf32>
    %cst_72 = arith.constant 9.99999974E-6 : f32
    %145 = vector.broadcast %cst_72 : f32 to vector<8x1xf32>
    %146 = arith.addf %142, %145 : vector<8x1xf32>
    %147 = math.rsqrt %146 : vector<8x1xf32>
    %148 = vector.broadcast %147 : vector<8x1xf32> to vector<8x128xf32>
    %149 = arith.mulf %144, %148 : vector<8x128xf32>
    %150 = vector.broadcast %130 : vector<1x128xf32> to vector<8x128xf32>
    %151 = arith.mulf %149, %150 : vector<8x128xf32>
    %152 = vector.broadcast %131 : vector<1x128xf32> to vector<8x128xf32>
    %153 = arith.addf %151, %152 : vector<8x128xf32>
    %c0_73 = arith.constant 0 : index
    %c0_74 = arith.constant 0 : index
    %c0_75 = arith.constant 0 : index
    %154 = vector.load %arg19[%c0_73, %c0_74, %c0_75] : memref<1x8x128xf32, #tpu.memory_space<vmem>>, vector<1x8x128xf32>
    %155 = vector.shape_cast %154 : vector<1x8x128xf32> to vector<8x128xf32>
    %156 = vector.shape_cast %153 : vector<8x128xf32> to vector<1x8x128xf32>
    tpu.vector_store %arg19[%c0_73, %c0_74, %c0_75], %156 {strides = array<i32>} : memref<1x8x128xf32, #tpu.memory_space<vmem>>, vector<1x8x128xf32>,
    return
  }
  func.func @transform_0(%arg0: i32) -> (i32, i32, i32) {
    %c0_i32 = arith.constant 0 : i32
    %c0_i32_0 = arith.constant 0 : i32
    %c0_i32_1 = arith.constant 0 : i32
    return %arg0, %c0_i32, %c0_i32_0 : i32, i32, i32
  }
  func.func @transform_1(%arg0: i32) -> (i32, i32, i32) {
    %c0_i32 = arith.constant 0 : i32
    %c0_i32_0 = arith.constant 0 : i32
    %c0_i32_1 = arith.constant 0 : i32
    return %arg0, %c0_i32, %c0_i32_0 : i32, i32, i32
  }
  func.func @transform_2(%arg0: i32) -> (i32, i32) {
    %c0_i32 = arith.constant 0 : i32
    %c0_i32_0 = arith.constant 0 : i32
    %c0_i32_1 = arith.constant 0 : i32
    return %c0_i32, %c0_i32_0 : i32, i32
  }
  func.func @transform_3(%arg0: i32) -> (i32, i32) {
    %c0_i32 = arith.constant 0 : i32
    %c0_i32_0 = arith.constant 0 : i32
    %c0_i32_1 = arith.constant 0 : i32
    return %c0_i32, %c0_i32_0 : i32, i32
  }
  func.func @transform_4(%arg0: i32) -> (i32, i32) {
    %c0_i32 = arith.constant 0 : i32
    %c0_i32_0 = arith.constant 0 : i32
    %c0_i32_1 = arith.constant 0 : i32
    return %c0_i32, %c0_i32_0 : i32, i32
  }
  func.func @transform_5(%arg0: i32) -> (i32, i32) {
    %c0_i32 = arith.constant 0 : i32
    %c0_i32_0 = arith.constant 0 : i32
    %c0_i32_1 = arith.constant 0 : i32
    return %c0_i32, %c0_i32_0 : i32, i32
  }
  func.func @transform_6(%arg0: i32) -> (i32, i32) {
    %c0_i32 = arith.constant 0 : i32
    %c0_i32_0 = arith.constant 0 : i32
    %c0_i32_1 = arith.constant 0 : i32
    return %c0_i32, %c0_i32_0 : i32, i32
  }
  func.func @transform_7(%arg0: i32) -> (i32, i32) {
    %c0_i32 = arith.constant 0 : i32
    %c0_i32_0 = arith.constant 0 : i32
    %c0_i32_1 = arith.constant 0 : i32
    return %c0_i32, %c0_i32_0 : i32, i32
  }
  func.func @transform_8(%arg0: i32) -> (i32, i32) {
    %c0_i32 = arith.constant 0 : i32
    %c0_i32_0 = arith.constant 0 : i32
    %c0_i32_1 = arith.constant 0 : i32
    return %c0_i32, %c0_i32_0 : i32, i32
  }
  func.func @transform_9(%arg0: i32) -> (i32, i32) {
    %c0_i32 = arith.constant 0 : i32
    %c0_i32_0 = arith.constant 0 : i32
    %c0_i32_1 = arith.constant 0 : i32
    return %c0_i32, %c0_i32_0 : i32, i32
  }
  func.func @transform_10(%arg0: i32) -> (i32, i32) {
    %c0_i32 = arith.constant 0 : i32
    %c0_i32_0 = arith.constant 0 : i32
    %c0_i32_1 = arith.constant 0 : i32
    return %c0_i32, %c0_i32_0 : i32, i32
  }
  func.func @transform_11(%arg0: i32) -> (i32, i32) {
    %c0_i32 = arith.constant 0 : i32
    %c0_i32_0 = arith.constant 0 : i32
    %c0_i32_1 = arith.constant 0 : i32
    return %c0_i32, %c0_i32_0 : i32, i32
  }
  func.func @transform_12(%arg0: i32) -> (i32, i32) {
    %c0_i32 = arith.constant 0 : i32
    %c0_i32_0 = arith.constant 0 : i32
    %c0_i32_1 = arith.constant 0 : i32
    return %c0_i32, %c0_i32_0 : i32, i32
  }
  func.func @transform_13(%arg0: i32) -> (i32, i32) {
    %c0_i32 = arith.constant 0 : i32
    %c0_i32_0 = arith.constant 0 : i32
    %c0_i32_1 = arith.constant 0 : i32
    return %c0_i32, %c0_i32_0 : i32, i32
  }
  func.func @transform_14(%arg0: i32) -> (i32, i32) {
    %c0_i32 = arith.constant 0 : i32
    %c0_i32_0 = arith.constant 0 : i32
    %c0_i32_1 = arith.constant 0 : i32
    return %c0_i32, %c0_i32_0 : i32, i32
  }
  func.func @transform_15(%arg0: i32) -> (i32, i32) {
    %c0_i32 = arith.constant 0 : i32
    %c0_i32_0 = arith.constant 0 : i32
    %c0_i32_1 = arith.constant 0 : i32
    return %c0_i32, %c0_i32_0 : i32, i32
  }
  func.func @transform_16(%arg0: i32) -> (i32, i32) {
    %c0_i32 = arith.constant 0 : i32
    %c0_i32_0 = arith.constant 0 : i32
    %c0_i32_1 = arith.constant 0 : i32
    return %c0_i32, %c0_i32_0 : i32, i32
  }
  func.func @transform_17(%arg0: i32) -> (i32, i32) {
    %c0_i32 = arith.constant 0 : i32
    %c0_i32_0 = arith.constant 0 : i32
    %c0_i32_1 = arith.constant 0 : i32
    return %c0_i32, %c0_i32_0 : i32, i32
  }
  func.func @transform_18(%arg0: i32) -> (i32, i32, i32) {
    %c0_i32 = arith.constant 0 : i32
    %c0_i32_0 = arith.constant 0 : i32
    %c0_i32_1 = arith.constant 0 : i32
    return %arg0, %c0_i32, %c0_i32_0 : i32, i32, i32
  }
}

</mosaic_0001>

<llo_original>
// kernel: tpu_custom_call.1
$region0: #{tpu_custom_call.1}
  #allocation0 [shape = 'u32[]', space=smem, size = 0x4, offset = 0x4, fixed_abs, tag = 'smem constant byte address 0x4 - core index']
  #allocation1 [shape = 'u32[144,128]{1,0:T(1,128)}', space=vmem, size = 0x12000, scoped, tag = 'internal scratch']
  %s0 = inlined_call_operand.hbm [shape: f32[2,8,128], index: 0, kind: input, shape index: {}]
  %s1 = inlined_call_operand.hbm [shape: f32[2,8,8], index: 1, kind: input, shape index: {}]
  %s2 = inlined_call_operand.hbm [shape: f32[128,128], index: 2, kind: input, shape index: {}]
  %s3 = inlined_call_operand.vmem [shape: f32[1,128], index: 3, kind: input, shape index: {}]
  %s4 = inlined_call_operand.hbm [shape: f32[128,128], index: 4, kind: input, shape index: {}]
  %s5 = inlined_call_operand.vmem [shape: f32[1,128], index: 5, kind: input, shape index: {}]
  %s6 = inlined_call_operand.hbm [shape: f32[128,128], index: 6, kind: input, shape index: {}]
  %s7 = inlined_call_operand.vmem [shape: f32[1,128], index: 7, kind: input, shape index: {}]
  %s8 = inlined_call_operand.hbm [shape: f32[128,128], index: 8, kind: input, shape index: {}]
  %s9 = inlined_call_operand.vmem [shape: f32[1,128], index: 9, kind: input, shape index: {}]
  %s10 = inlined_call_operand.vmem [shape: f32[1,128], index: 10, kind: input, shape index: {}]
  %s11 = inlined_call_operand.vmem [shape: f32[1,128], index: 11, kind: input, shape index: {}]
  %s12 = inlined_call_operand.hbm [shape: f32[128,256], index: 12, kind: input, shape index: {}]
  %s13 = inlined_call_operand.vmem [shape: f32[1,256], index: 13, kind: input, shape index: {}]
  %s14 = inlined_call_operand.hbm [shape: f32[256,128], index: 14, kind: input, shape index: {}]
  %s15 = inlined_call_operand.vmem [shape: f32[1,128], index: 15, kind: input, shape index: {}]
  %s16 = inlined_call_operand.vmem [shape: f32[1,128], index: 16, kind: input, shape index: {}]
  %s17 = inlined_call_operand.vmem [shape: f32[1,128], index: 17, kind: input, shape index: {}]
  %s18 = inlined_call_operand.hbm [shape: f32[2,8,128], index: 18, kind: output, shape index: {}]
  %s19 = sld [smem:[#allocation0]]
  $region137: #{tpu_custom_call.1} parent=0
    _
  %s21 = ssub.s32 1, %s19
  %s22 = scalar_select 0, %s21, %s19
  $region1: #{tpu_custom_call.1} parent=0
    #allocation2 [shape = 'u8[8192]{0}', space=vmem, size = 0x2000, scoped, tag = 'input window, operand 0']
    #allocation3 [shape = 's32[2]{0}', space=sflag, size = 0x8, scoped, tag = 'scoped memory for tpu_custom_call.1']
    #allocation4 [shape = 's32[2]{0}', space=sflag, size = 0x8, scoped, tag = 'scoped memory for tpu_custom_call.1']
    #allocation5 [shape = 'u8[8192]{0}', space=vmem, size = 0x2000, scoped, tag = 'input window, operand 1']
    #allocation6 [shape = 's32[2]{0}', space=sflag, size = 0x8, scoped, tag = 'scoped memory for tpu_custom_call.1']
    #allocation7 [shape = 'u8[65536]{0}', space=vmem, size = 0x10000, scoped, tag = 'input window, operand 2, single buffered']
    #allocation8 [shape = 'u8[65536]{0}', space=vmem, size = 0x10000, scoped, tag = 'input window, operand 4, single buffered']
    #allocation9 [shape = 's32[1]{0}', space=sflag, size = 0x4, scoped, tag = 'scoped memory for tpu_custom_call.1']
    #allocation10 [shape = 'u8[65536]{0}', space=vmem, size = 0x10000, scoped, tag = 'input window, operand 6, single buffered']
    #allocation11 [shape = 'u8[65536]{0}', space=vmem, size = 0x10000, scoped, tag = 'input window, operand 8, single buffered']
    #allocation12 [shape = 's32[1]{0}', space=sflag, size = 0x4, scoped, tag = 'scoped memory for tpu_custom_call.1']
    #allocation13 [shape = 'u8[131072]{0}', space=vmem, size = 0x20000, scoped, tag = 'input window, operand 12, single buffered']
    #allocation14 [shape = 'u8[131072]{0}', space=vmem, size = 0x20000, scoped, tag = 'input window, operand 14, single buffered']
    #allocation15 [shape = 's32[1]{0}', space=sflag, size = 0x4, scoped, tag = 'scoped memory for tpu_custom_call.1']
    #allocation16 [shape = 'u8[8192]{0}', space=vmem, size = 0x2000, scoped, tag = 'output window, operand 0']
    %23 = vsyncpa [#allocation3], 0
    %s24 = scalar_lea.sflag [#allocation3], 1
    %25 = vsyncpa %s24, 0
    %26 = vsyncpa [#allocation6], 0
    %s27 = scalar_lea.sflag [#allocation6], 1
    %28 = vsyncpa %s27, 0
    %29 = vsyncpa [#allocation9], 0
    %30 = vsyncpa [#allocation12], 0
    %31 = vsyncpa [#allocation15], 0
    %32 = vsyncpa [#allocation4], 0
    %s33 = scalar_lea.sflag [#allocation4], 1
    %34 = vsyncpa %s33, 0
    loop: start=0, step=1, limit=4
    $region2: #{tpu_custom_call.1} parent=1 // loop_pre_header
      _
    $region3: #{tpu_custom_call.1} parent=1 // loop_header
      %s36 = sphi 0, %s40
      %p37 = scmp.ge.s32.totalorder %s36, 4
      %s46 = sphi 0, %s48
      %s49 = sphi 0, %s46
      %s50 = sphi 0, %s49
      %s66 = sphi 0, %s50
      %s72 = sphi 0, %s74
      %s75 = sphi 0, %s72
      %s76 = sphi 0, %s75
      %s92 = sphi 0, %s76
      %s96 = sphi 0, %s96
      %s98 = sphi 0, %s96
      %s99 = sphi 0, %s98
      %s113 = sphi 0, %s99
      %s117 = sphi 0, %s117
      %s119 = sphi 0, %s117
      %s120 = sphi 0, %s119
      %s134 = sphi 0, %s120
      %s138 = sphi 0, %s138
      %s140 = sphi 0, %s138
      %s141 = sphi 0, %s140
      %s155 = sphi 0, %s141
      %s159 = sphi 0, %s159
      %s161 = sphi 0, %s159
      %s162 = sphi 0, %s161
      %s176 = sphi 0, %s162
      %s180 = sphi 0, %s180
      %s182 = sphi 0, %s180
      %s183 = sphi 0, %s182
      %s197 = sphi 0, %s183
      %s201 = sphi 0, %s201
      %s203 = sphi 0, %s201
      %s204 = sphi 0, %s203
      %s218 = sphi 0, %s204
      %s222 = sphi 0, %s222
      %s224 = sphi 0, %s222
      %s225 = sphi 0, %s224
      %s239 = sphi 0, %s225
      %s243 = sphi 0, %s243
      %s245 = sphi 0, %s243
      %s246 = sphi 0, %s245
      %s260 = sphi 0, %s246
      %s264 = sphi 0, %s264
      %s266 = sphi 0, %s264
      %s267 = sphi 0, %s266
      %s281 = sphi 0, %s267
      %s285 = sphi 0, %s285
      %s287 = sphi 0, %s285
      %s288 = sphi 0, %s287
      %s302 = sphi 0, %s288
      %s306 = sphi 0, %s306
      %s308 = sphi 0, %s306
      %s309 = sphi 0, %s308
      %s323 = sphi 0, %s309
      %s327 = sphi 0, %s327
      %s329 = sphi 0, %s327
      %s330 = sphi 0, %s329
      %s344 = sphi 0, %s330
      %s348 = sphi 0, %s348
      %s350 = sphi 0, %s348
      %s351 = sphi 0, %s350
      %s365 = sphi 0, %s351
      %s369 = sphi 0, %s369
      %s371 = sphi 0, %s369
      %s372 = sphi 0, %s371
      %s386 = sphi 0, %s372
      %s390 = sphi 0, %s390
      %s392 = sphi 0, %s390
      %s393 = sphi 0, %s392
      %s407 = sphi 0, %s393
      %s411 = sphi 0, %s411
      %s413 = sphi 0, %s411
      %s414 = sphi 0, %s413
      %s428 = sphi 0, %s414
      %s434 = sphi 0, %s436
      %s437 = sphi 0, %s434
      %s438 = sphi 0, %s437
      %s454 = sphi 0, %s438
    $region4: #{tpu_custom_call.1} parent=1 // loop_header_branch
      %39 = sbr.rel (%p37) target = $region8
    $region5: #{tpu_custom_call.1} parent=1 // loop_body
      %s41 = ssub.s32 %s36, 1
      %s42 = ssub.s32 %s36, 2
      %s43 = sadd.s32 %s36, 1
      %s44 = ssub.s32 %s36, %s43
      %p45 = scmp.eq.s32.totalorder %s44, 0
      %s47 = sadd.s32 %s46, 1
      %s48 = scalar_select %p45, %s46, %s47
      %p51 = pneg %p45
      %p52 = scmp.eq.s32.totalorder %s36, 1
      %p53 = por %p51, %p52
      %p54 = scmp.ne.s32.totalorder %s46, %s49
      %p55 = scmp.eq.s32.totalorder %s36, 0
      %p56 = por %p54, %p55
      %p57 = scmp.ne.s32.totalorder %s46, %s49
      %p58 = scmp.eq.s32.totalorder %s41, 1
      %p59 = por %p57, %p58
      %p60 = scmp.ne.s32.totalorder %s49, %s50
      %p61 = scmp.eq.s32.totalorder %s41, 0
      %p62 = por %p60, %p61
      %p63 = scmp.ne.s32.totalorder %s49, %s50
      %p64 = scmp.eq.s32.totalorder %s42, 1
      %p65 = por %p63, %p64
      %p67 = scmp.ne.s32.totalorder %s50, %s66
      %p68 = scmp.eq.s32.totalorder %s42, 0
      %p69 = por %p67, %p68
      %s70 = ssub.s32 %s36, %s43
      %p71 = scmp.eq.s32.totalorder %s70, 0
      %s73 = sadd.s32 %s72, 1
      %s74 = scalar_select %p71, %s72, %s73
      %p77 = pneg %p71
      %p78 = scmp.eq.s32.totalorder %s36, 1
      %p79 = por %p77, %p78
      %p80 = scmp.ne.s32.totalorder %s72, %s75
      %p81 = scmp.eq.s32.totalorder %s36, 0
      %p82 = por %p80, %p81
      %p83 = scmp.ne.s32.totalorder %s72, %s75
      %p84 = scmp.eq.s32.totalorder %s41, 1
      %p85 = por %p83, %p84
      %p86 = scmp.ne.s32.totalorder %s75, %s76
      %p87 = scmp.eq.s32.totalorder %s41, 0
      %p88 = por %p86, %p87
      %p89 = scmp.ne.s32.totalorder %s75, %s76
      %p90 = scmp.eq.s32.totalorder %s42, 1
      %p91 = por %p89, %p90
      %p93 = scmp.ne.s32.totalorder %s76, %s92
      %p94 = scmp.eq.s32.totalorder %s42, 0
      %p95 = por %p93, %p94
      %s97 = sadd.s32 %s96, 1
      %p100 = scmp.eq.s32.totalorder %s36, 1
      %p101 = scmp.ne.s32.totalorder %s96, %s98
      %p102 = scmp.eq.s32.totalorder %s36, 0
      %p103 = por %p101, %p102
      %p104 = scmp.ne.s32.totalorder %s96, %s98
      %p105 = scmp.eq.s32.totalorder %s41, 1
      %p106 = por %p104, %p105
      %p107 = scmp.ne.s32.totalorder %s98, %s99
      %p108 = scmp.eq.s32.totalorder %s41, 0
      %p109 = por %p107, %p108
      %p110 = scmp.ne.s32.totalorder %s98, %s99
      %p111 = scmp.eq.s32.totalorder %s42, 1
      %p112 = por %p110, %p111
      %p114 = scmp.ne.s32.totalorder %s99, %s113
      %p115 = scmp.eq.s32.totalorder %s42, 0
      %p116 = por %p114, %p115
      %s118 = sadd.s32 %s117, 1
      %p121 = scmp.eq.s32.totalorder %s36, 1
      %p122 = scmp.ne.s32.totalorder %s117, %s119
      %p123 = scmp.eq.s32.totalorder %s36, 0
      %p124 = por %p122, %p123
      %p125 = scmp.ne.s32.totalorder %s117, %s119
      %p126 = scmp.eq.s32.totalorder %s41, 1
      %p127 = por %p125, %p126
      %p128 = scmp.ne.s32.totalorder %s119, %s120
      %p129 = scmp.eq.s32.totalorder %s41, 0
      %p130 = por %p128, %p129
      %p131 = scmp.ne.s32.totalorder %s119, %s120
      %p132 = scmp.eq.s32.totalorder %s42, 1
      %p133 = por %p131, %p132
      %p135 = scmp.ne.s32.totalorder %s120, %s134
      %p136 = scmp.eq.s32.totalorder %s42, 0
      %p137 = por %p135, %p136
      %s139 = sadd.s32 %s138, 1
      %p142 = scmp.eq.s32.totalorder %s36, 1
      %p143 = scmp.ne.s32.totalorder %s138, %s140
      %p144 = scmp.eq.s32.totalorder %s36, 0
      %p145 = por %p143, %p144
      %p146 = scmp.ne.s32.totalorder %s138, %s140
      %p147 = scmp.eq.s32.totalorder %s41, 1
      %p148 = por %p146, %p147
      %p149 = scmp.ne.s32.totalorder %s140, %s141
      %p150 = scmp.eq.s32.totalorder %s41, 0
      %p151 = por %p149, %p150
      %p152 = scmp.ne.s32.totalorder %s140, %s141
      %p153 = scmp.eq.s32.totalorder %s42, 1
      %p154 = por %p152, %p153
      %p156 = scmp.ne.s32.totalorder %s141, %s155
      %p157 = scmp.eq.s32.totalorder %s42, 0
      %p158 = por %p156, %p157
      %s160 = sadd.s32 %s159, 1
      %p163 = scmp.eq.s32.totalorder %s36, 1
      %p164 = scmp.ne.s32.totalorder %s159, %s161
      %p165 = scmp.eq.s32.totalorder %s36, 0
      %p166 = por %p164, %p165
      %p167 = scmp.ne.s32.totalorder %s159, %s161
      %p168 = scmp.eq.s32.totalorder %s41, 1
      %p169 = por %p167, %p168
      %p170 = scmp.ne.s32.totalorder %s161, %s162
      %p171 = scmp.eq.s32.totalorder %s41, 0
      %p172 = por %p170, %p171
      %p173 = scmp.ne.s32.totalorder %s161, %s162
      %p174 = scmp.eq.s32.totalorder %s42, 1
      %p175 = por %p173, %p174
      %p177 = scmp.ne.s32.totalorder %s162, %s176
      %p178 = scmp.eq.s32.totalorder %s42, 0
      %p179 = por %p177, %p178
      %s181 = sadd.s32 %s180, 1
      %p184 = scmp.eq.s32.totalorder %s36, 1
      %p185 = scmp.ne.s32.totalorder %s180, %s182
      %p186 = scmp.eq.s32.totalorder %s36, 0
      %p187 = por %p185, %p186
      %p188 = scmp.ne.s32.totalorder %s180, %s182
      %p189 = scmp.eq.s32.totalorder %s41, 1
      %p190 = por %p188, %p189
      %p191 = scmp.ne.s32.totalorder %s182, %s183
      %p192 = scmp.eq.s32.totalorder %s41, 0
      %p193 = por %p191, %p192
      %p194 = scmp.ne.s32.totalorder %s182, %s183
      %p195 = scmp.eq.s32.totalorder %s42, 1
      %p196 = por %p194, %p195
      %p198 = scmp.ne.s32.totalorder %s183, %s197
      %p199 = scmp.eq.s32.totalorder %s42, 0
      %p200 = por %p198, %p199
      %s202 = sadd.s32 %s201, 1
      %p205 = scmp.eq.s32.totalorder %s36, 1
      %p206 = scmp.ne.s32.totalorder %s201, %s203
      %p207 = scmp.eq.s32.totalorder %s36, 0
      %p208 = por %p206, %p207
      %p209 = scmp.ne.s32.totalorder %s201, %s203
      %p210 = scmp.eq.s32.totalorder %s41, 1
      %p211 = por %p209, %p210
      %p212 = scmp.ne.s32.totalorder %s203, %s204
      %p213 = scmp.eq.s32.totalorder %s41, 0
      %p214 = por %p212, %p213
      %p215 = scmp.ne.s32.totalorder %s203, %s204
      %p216 = scmp.eq.s32.totalorder %s42, 1
      %p217 = por %p215, %p216
      %p219 = scmp.ne.s32.totalorder %s204, %s218
      %p220 = scmp.eq.s32.totalorder %s42, 0
      %p221 = por %p219, %p220
      %s223 = sadd.s32 %s222, 1
      %p226 = scmp.eq.s32.totalorder %s36, 1
      %p227 = scmp.ne.s32.totalorder %s222, %s224
      %p228 = scmp.eq.s32.totalorder %s36, 0
      %p229 = por %p227, %p228
      %p230 = scmp.ne.s32.totalorder %s222, %s224
      %p231 = scmp.eq.s32.totalorder %s41, 1
      %p232 = por %p230, %p231
      %p233 = scmp.ne.s32.totalorder %s224, %s225
      %p234 = scmp.eq.s32.totalorder %s41, 0
      %p235 = por %p233, %p234
      %p236 = scmp.ne.s32.totalorder %s224, %s225
      %p237 = scmp.eq.s32.totalorder %s42, 1
      %p238 = por %p236, %p237
      %p240 = scmp.ne.s32.totalorder %s225, %s239
      %p241 = scmp.eq.s32.totalorder %s42, 0
      %p242 = por %p240, %p241
      %s244 = sadd.s32 %s243, 1
      %p247 = scmp.eq.s32.totalorder %s36, 1
      %p248 = scmp.ne.s32.totalorder %s243, %s245
      %p249 = scmp.eq.s32.totalorder %s36, 0
      %p250 = por %p248, %p249
      %p251 = scmp.ne.s32.totalorder %s243, %s245
      %p252 = scmp.eq.s32.totalorder %s41, 1
      %p253 = por %p251, %p252
      %p254 = scmp.ne.s32.totalorder %s245, %s246
      %p255 = scmp.eq.s32.totalorder %s41, 0
      %p256 = por %p254, %p255
      %p257 = scmp.ne.s32.totalorder %s245, %s246
      %p258 = scmp.eq.s32.totalorder %s42, 1
      %p259 = por %p257, %p258
      %p261 = scmp.ne.s32.totalorder %s246, %s260
      %p262 = scmp.eq.s32.totalorder %s42, 0
      %p263 = por %p261, %p262
      %s265 = sadd.s32 %s264, 1
      %p268 = scmp.eq.s32.totalorder %s36, 1
      %p269 = scmp.ne.s32.totalorder %s264, %s266
      %p270 = scmp.eq.s32.totalorder %s36, 0
      %p271 = por %p269, %p270
      %p272 = scmp.ne.s32.totalorder %s264, %s266
      %p273 = scmp.eq.s32.totalorder %s41, 1
      %p274 = por %p272, %p273
      %p275 = scmp.ne.s32.totalorder %s266, %s267
      %p276 = scmp.eq.s32.totalorder %s41, 0
      %p277 = por %p275, %p276
      %p278 = scmp.ne.s32.totalorder %s266, %s267
      %p279 = scmp.eq.s32.totalorder %s42, 1
      %p280 = por %p278, %p279
      %p282 = scmp.ne.s32.totalorder %s267, %s281
      %p283 = scmp.eq.s32.totalorder %s42, 0
      %p284 = por %p282, %p283
      %s286 = sadd.s32 %s285, 1
      %p289 = scmp.eq.s32.totalorder %s36, 1
      %p290 = scmp.ne.s32.totalorder %s285, %s287
      %p291 = scmp.eq.s32.totalorder %s36, 0
      %p292 = por %p290, %p291
      %p293 = scmp.ne.s32.totalorder %s285, %s287
      %p294 = scmp.eq.s32.totalorder %s41, 1
      %p295 = por %p293, %p294
      %p296 = scmp.ne.s32.totalorder %s287, %s288
      %p297 = scmp.eq.s32.totalorder %s41, 0
      %p298 = por %p296, %p297
      %p299 = scmp.ne.s32.totalorder %s287, %s288
      %p300 = scmp.eq.s32.totalorder %s42, 1
      %p301 = por %p299, %p300
      %p303 = scmp.ne.s32.totalorder %s288, %s302
      %p304 = scmp.eq.s32.totalorder %s42, 0
      %p305 = por %p303, %p304
      %s307 = sadd.s32 %s306, 1
      %p310 = scmp.eq.s32.totalorder %s36, 1
      %p311 = scmp.ne.s32.totalorder %s306, %s308
      %p312 = scmp.eq.s32.totalorder %s36, 0
      %p313 = por %p311, %p312
      %p314 = scmp.ne.s32.totalorder %s306, %s308
      %p315 = scmp.eq.s32.totalorder %s41, 1
      %p316 = por %p314, %p315
      %p317 = scmp.ne.s32.totalorder %s308, %s309
      %p318 = scmp.eq.s32.totalorder %s41, 0
      %p319 = por %p317, %p318
      %p320 = scmp.ne.s32.totalorder %s308, %s309
      %p321 = scmp.eq.s32.totalorder %s42, 1
      %p322 = por %p320, %p321
      %p324 = scmp.ne.s32.totalorder %s309, %s323
      %p325 = scmp.eq.s32.totalorder %s42, 0
      %p326 = por %p324, %p325
      %s328 = sadd.s32 %s327, 1
      %p331 = scmp.eq.s32.totalorder %s36, 1
      %p332 = scmp.ne.s32.totalorder %s327, %s329
      %p333 = scmp.eq.s32.totalorder %s36, 0
      %p334 = por %p332, %p333
      %p335 = scmp.ne.s32.totalorder %s327, %s329
      %p336 = scmp.eq.s32.totalorder %s41, 1
      %p337 = por %p335, %p336
      %p338 = scmp.ne.s32.totalorder %s329, %s330
      %p339 = scmp.eq.s32.totalorder %s41, 0
      %p340 = por %p338, %p339
      %p341 = scmp.ne.s32.totalorder %s329, %s330
      %p342 = scmp.eq.s32.totalorder %s42, 1
      %p343 = por %p341, %p342
      %p345 = scmp.ne.s32.totalorder %s330, %s344
      %p346 = scmp.eq.s32.totalorder %s42, 0
      %p347 = por %p345, %p346
      %s349 = sadd.s32 %s348, 1
      %p352 = scmp.eq.s32.totalorder %s36, 1
      %p353 = scmp.ne.s32.totalorder %s348, %s350
      %p354 = scmp.eq.s32.totalorder %s36, 0
      %p355 = por %p353, %p354
      %p356 = scmp.ne.s32.totalorder %s348, %s350
      %p357 = scmp.eq.s32.totalorder %s41, 1
      %p358 = por %p356, %p357
      %p359 = scmp.ne.s32.totalorder %s350, %s351
      %p360 = scmp.eq.s32.totalorder %s41, 0
      %p361 = por %p359, %p360
      %p362 = scmp.ne.s32.totalorder %s350, %s351
      %p363 = scmp.eq.s32.totalorder %s42, 1
      %p364 = por %p362, %p363
      %p366 = scmp.ne.s32.totalorder %s351, %s365
      %p367 = scmp.eq.s32.totalorder %s42, 0
      %p368 = por %p366, %p367
      %s370 = sadd.s32 %s369, 1
      %p373 = scmp.eq.s32.totalorder %s36, 1
      %p374 = scmp.ne.s32.totalorder %s369, %s371
      %p375 = scmp.eq.s32.totalorder %s36, 0
      %p376 = por %p374, %p375
      %p377 = scmp.ne.s32.totalorder %s369, %s371
      %p378 = scmp.eq.s32.totalorder %s41, 1
      %p379 = por %p377, %p378
      %p380 = scmp.ne.s32.totalorder %s371, %s372
      %p381 = scmp.eq.s32.totalorder %s41, 0
      %p382 = por %p380, %p381
      %p383 = scmp.ne.s32.totalorder %s371, %s372
      %p384 = scmp.eq.s32.totalorder %s42, 1
      %p385 = por %p383, %p384
      %p387 = scmp.ne.s32.totalorder %s372, %s386
      %p388 = scmp.eq.s32.totalorder %s42, 0
      %p389 = por %p387, %p388
      %s391 = sadd.s32 %s390, 1
      %p394 = scmp.eq.s32.totalorder %s36, 1
      %p395 = scmp.ne.s32.totalorder %s390, %s392
      %p396 = scmp.eq.s32.totalorder %s36, 0
      %p397 = por %p395, %p396
      %p398 = scmp.ne.s32.totalorder %s390, %s392
      %p399 = scmp.eq.s32.totalorder %s41, 1
      %p400 = por %p398, %p399
      %p401 = scmp.ne.s32.totalorder %s392, %s393
      %p402 = scmp.eq.s32.totalorder %s41, 0
      %p403 = por %p401, %p402
      %p404 = scmp.ne.s32.totalorder %s392, %s393
      %p405 = scmp.eq.s32.totalorder %s42, 1
      %p406 = por %p404, %p405
      %p408 = scmp.ne.s32.totalorder %s393, %s407
      %p409 = scmp.eq.s32.totalorder %s42, 0
      %p410 = por %p408, %p409
      %s412 = sadd.s32 %s411, 1
      %p415 = scmp.eq.s32.totalorder %s36, 1
      %p416 = scmp.ne.s32.totalorder %s411, %s413
      %p417 = scmp.eq.s32.totalorder %s36, 0
      %p418 = por %p416, %p417
      %p419 = scmp.ne.s32.totalorder %s411, %s413
      %p420 = scmp.eq.s32.totalorder %s41, 1
      %p421 = por %p419, %p420
      %p422 = scmp.ne.s32.totalorder %s413, %s414
      %p423 = scmp.eq.s32.totalorder %s41, 0
      %p424 = por %p422, %p423
      %p425 = scmp.ne.s32.totalorder %s413, %s414
      %p426 = scmp.eq.s32.totalorder %s42, 1
      %p427 = por %p425, %p426
      %p429 = scmp.ne.s32.totalorder %s414, %s428
      %p430 = scmp.eq.s32.totalorder %s42, 0
      %p431 = por %p429, %p430
      %s432 = ssub.s32 %s36, %s43
      %p433 = scmp.eq.s32.totalorder %s432, 0
      %s435 = sadd.s32 %s434, 1
      %s436 = scalar_select %p433, %s434, %s435
      %p439 = pneg %p433
      %p440 = scmp.eq.s32.totalorder %s36, 1
      %p441 = por %p439, %p440
      %p442 = scmp.ne.s32.totalorder %s434, %s437
      %p443 = scmp.eq.s32.totalorder %s36, 0
      %p444 = por %p442, %p443
      %p445 = scmp.ne.s32.totalorder %s434, %s437
      %p446 = scmp.eq.s32.totalorder %s41, 1
      %p447 = por %p445, %p446
      %p448 = scmp.ne.s32.totalorder %s437, %s438
      %p449 = scmp.eq.s32.totalorder %s41, 0
      %p450 = por %p448, %p449
      %p451 = scmp.ne.s32.totalorder %s437, %s438
      %p452 = scmp.eq.s32.totalorder %s42, 1
      %p453 = por %p451, %p452
      %p455 = scmp.ne.s32.totalorder %s438, %s454
      %p456 = scmp.eq.s32.totalorder %s42, 0
      %p457 = por %p455, %p456
      %p458 = scmp.le.s32.totalorder 1, %s36
      %p459 = scmp.lt.s32.totalorder %s36, 3
      %p460 = pnand %p458, %p459
      %p461 = pneg %p460
      // Predicated region
      $region9: #{tpu_custom_call.1} parent=5 // pred_check
        _
      $region10: #{tpu_custom_call.1} parent=5 // pred_check_branch
        %463 = sbr.rel (%p460) target = $region12
      $region11: #{tpu_custom_call.1} parent=5 // pred_region
        %s464 = ssub.s32 %s36, 1
        // Predicated region
        $region13: #{tpu_custom_call.1} parent=11 // pred_check
          %p465 = pneg %p109
        $region14: #{tpu_custom_call.1} parent=11 // pred_check_branch
          %467 = sbr.rel (%p465) target = $region16
        $region15: #{tpu_custom_call.1} parent=11 // pred_region
          %s469 = ssub.s32 2048, 2048
          %470 = vsyncadd [#allocation6], %s469
          %s471 = sshll.u32 [#allocation7], 4
          %s472 = int_to_ptr.vmem [resolvable:$true] %s471
          %477 = dma.hbm_to_vmem [thread:$0]  %s2, 2048, %s472, [#allocation6], 128, 128, 8
        $region16: #{tpu_custom_call.1} parent=11 // pred_fallthru
          _
        // Predicated region
        $region17: #{tpu_custom_call.1} parent=11 // pred_check
          %p478 = pneg %p130
        $region18: #{tpu_custom_call.1} parent=11 // pred_check_branch
          %480 = sbr.rel (%p478) target = $region20
        $region19: #{tpu_custom_call.1} parent=11 // pred_region
          _
        $region20: #{tpu_custom_call.1} parent=11 // pred_fallthru
          _
        // Predicated region
        $region21: #{tpu_custom_call.1} parent=11 // pred_check
          %p481 = pneg %p151
        $region22: #{tpu_custom_call.1} parent=11 // pred_check_branch
          %483 = sbr.rel (%p481) target = $region24
        $region23: #{tpu_custom_call.1} parent=11 // pred_region
          %s485 = ssub.s32 2048, 2048
          %486 = vsyncadd [#allocation9], %s485
          %s487 = sshll.u32 [#allocation8], 4
          %s488 = int_to_ptr.vmem [resolvable:$true] %s487
          %493 = dma.hbm_to_vmem [thread:$0]  %s4, 2048, %s488, [#allocation9], 128, 128, 8
        $region24: #{tpu_custom_call.1} parent=11 // pred_fallthru
          _
        // Predicated region
        $region25: #{tpu_custom_call.1} parent=11 // pred_check
          %p494 = pneg %p172
        $region26: #{tpu_custom_call.1} parent=11 // pred_check_branch
          %496 = sbr.rel (%p494) target = $region28
        $region27: #{tpu_custom_call.1} parent=11 // pred_region
          _
        $region28: #{tpu_custom_call.1} parent=11 // pred_fallthru
          _
        // Predicated region
        $region29: #{tpu_custom_call.1} parent=11 // pred_check
          %p497 = pneg %p193
        $region30: #{tpu_custom_call.1} parent=11 // pred_check_branch
          %499 = sbr.rel (%p497) target = $region32
        $region31: #{tpu_custom_call.1} parent=11 // pred_region
          %s501 = ssub.s32 2048, 2048
          %502 = vsyncadd [#allocation9], %s501
          %s503 = sshll.u32 [#allocation10], 4
          %s504 = int_to_ptr.vmem [resolvable:$true] %s503
          %509 = dma.hbm_to_vmem [thread:$0]  %s6, 2048, %s504, [#allocation9], 128, 128, 8
        $region32: #{tpu_custom_call.1} parent=11 // pred_fallthru
          _
        // Predicated region
        $region33: #{tpu_custom_call.1} parent=11 // pred_check
          %p510 = pneg %p214
        $region34: #{tpu_custom_call.1} parent=11 // pred_check_branch
          %512 = sbr.rel (%p510) target = $region36
        $region35: #{tpu_custom_call.1} parent=11 // pred_region
          _
        $region36: #{tpu_custom_call.1} parent=11 // pred_fallthru
          _
        // Predicated region
        $region37: #{tpu_custom_call.1} parent=11 // pred_check
          %p513 = pneg %p235
        $region38: #{tpu_custom_call.1} parent=11 // pred_check_branch
          %515 = sbr.rel (%p513) target = $region40
        $region39: #{tpu_custom_call.1} parent=11 // pred_region
          %s517 = ssub.s32 2048, 2048
          %518 = vsyncadd [#allocation12], %s517
          %s519 = sshll.u32 [#allocation11], 4
          %s520 = int_to_ptr.vmem [resolvable:$true] %s519
          %525 = dma.hbm_to_vmem [thread:$0]  %s8, 2048, %s520, [#allocation12], 128, 128, 8
        $region40: #{tpu_custom_call.1} parent=11 // pred_fallthru
          _
        // Predicated region
        $region41: #{tpu_custom_call.1} parent=11 // pred_check
          %p526 = pneg %p256
        $region42: #{tpu_custom_call.1} parent=11 // pred_check_branch
          %528 = sbr.rel (%p526) target = $region44
        $region43: #{tpu_custom_call.1} parent=11 // pred_region
          _
        $region44: #{tpu_custom_call.1} parent=11 // pred_fallthru
          _
        // Predicated region
        $region45: #{tpu_custom_call.1} parent=11 // pred_check
          %p529 = pneg %p277
        $region46: #{tpu_custom_call.1} parent=11 // pred_check_branch
          %531 = sbr.rel (%p529) target = $region48
        $region47: #{tpu_custom_call.1} parent=11 // pred_region
          _
        $region48: #{tpu_custom_call.1} parent=11 // pred_fallthru
          _
        // Predicated region
        $region49: #{tpu_custom_call.1} parent=11 // pred_check
          %p532 = pneg %p298
        $region50: #{tpu_custom_call.1} parent=11 // pred_check_branch
          %534 = sbr.rel (%p532) target = $region52
        $region51: #{tpu_custom_call.1} parent=11 // pred_region
          _
        $region52: #{tpu_custom_call.1} parent=11 // pred_fallthru
          _
        // Predicated region
        $region53: #{tpu_custom_call.1} parent=11 // pred_check
          %p535 = pneg %p319
        $region54: #{tpu_custom_call.1} parent=11 // pred_check_branch
          %537 = sbr.rel (%p535) target = $region56
        $region55: #{tpu_custom_call.1} parent=11 // pred_region
          %s539 = ssub.s32 4096, 4096
          %540 = vsyncadd [#allocation12], %s539
          %s541 = sshll.u32 [#allocation13], 4
          %s542 = int_to_ptr.vmem [resolvable:$true] %s541
          %547 = dma.hbm_to_vmem [thread:$0]  %s12, 4096, %s542, [#allocation12], 256, 256, 16
        $region56: #{tpu_custom_call.1} parent=11 // pred_fallthru
          _
        // Predicated region
        $region57: #{tpu_custom_call.1} parent=11 // pred_check
          %p548 = pneg %p340
        $region58: #{tpu_custom_call.1} parent=11 // pred_check_branch
          %550 = sbr.rel (%p548) target = $region60
        $region59: #{tpu_custom_call.1} parent=11 // pred_region
          _
        $region60: #{tpu_custom_call.1} parent=11 // pred_fallthru
          _
        // Predicated region
        $region61: #{tpu_custom_call.1} parent=11 // pred_check
          %p551 = pneg %p361
        $region62: #{tpu_custom_call.1} parent=11 // pred_check_branch
          %553 = sbr.rel (%p551) target = $region64
        $region63: #{tpu_custom_call.1} parent=11 // pred_region
          %s555 = ssub.s32 4096, 4096
          %556 = vsyncadd [#allocation15], %s555
          %s557 = sshll.u32 [#allocation14], 4
          %s558 = int_to_ptr.vmem [resolvable:$true] %s557
          %563 = dma.hbm_to_vmem [thread:$0]  %s14, 4096, %s558, [#allocation15], 128, 128, 8
        $region64: #{tpu_custom_call.1} parent=11 // pred_fallthru
          _
        // Predicated region
        $region65: #{tpu_custom_call.1} parent=11 // pred_check
          %p564 = pneg %p382
        $region66: #{tpu_custom_call.1} parent=11 // pred_check_branch
          %566 = sbr.rel (%p564) target = $region68
        $region67: #{tpu_custom_call.1} parent=11 // pred_region
          _
        $region68: #{tpu_custom_call.1} parent=11 // pred_fallthru
          _
        // Predicated region
        $region69: #{tpu_custom_call.1} parent=11 // pred_check
          %p567 = pneg %p403
        $region70: #{tpu_custom_call.1} parent=11 // pred_check_branch
          %569 = sbr.rel (%p567) target = $region72
        $region71: #{tpu_custom_call.1} parent=11 // pred_region
          _
        $region72: #{tpu_custom_call.1} parent=11 // pred_fallthru
          _
        // Predicated region
        $region73: #{tpu_custom_call.1} parent=11 // pred_check
          %p570 = pneg %p424
        $region74: #{tpu_custom_call.1} parent=11 // pred_check_branch
          %572 = sbr.rel (%p570) target = $region76
        $region75: #{tpu_custom_call.1} parent=11 // pred_region
          _
        $region76: #{tpu_custom_call.1} parent=11 // pred_fallthru
          _
      $region12: #{tpu_custom_call.1} parent=5 // pred_fallthru
        _
      %p573 = scmp.lt.s32.totalorder %s36, 2
      // Predicated region
      $region77: #{tpu_custom_call.1} parent=5 // pred_check
        %p574 = pneg %p573
      $region78: #{tpu_custom_call.1} parent=5 // pred_check_branch
        %576 = sbr.rel (%p574) target = $region80
      $region79: #{tpu_custom_call.1} parent=5 // pred_region
        // Predicated region
        $region81: #{tpu_custom_call.1} parent=79 // pred_check
          %p577 = pneg %p56
        $region82: #{tpu_custom_call.1} parent=79 // pred_check_branch
          %579 = sbr.rel (%p577) target = $region84
        $region83: #{tpu_custom_call.1} parent=79 // pred_region
          %s580 = sand.u32 %s46, 1
          %s581 = scalar_lea.sflag [#allocation3], %s580
          %s582 = sand.u32 %s46, 1
          %s583 = smul.addr %s582, 8
          %s584 = scalar_lea.vmem [#allocation2], %s583
          %s586 = ssub.s32 128, 128
          %587 = vsyncadd %s581, %s586
          %s588 = smul.addr %s36, 128
          %s589 = scalar_lea.hbm %s0, %s588
          %s591 = sshll.u32 %s584, 4
          %s592 = int_to_ptr.vmem [resolvable:$true] %s591
          %594 = dma.hbm_to_vmem [thread:$0]  %s589, 128, %s592, %s581
        $region84: #{tpu_custom_call.1} parent=79 // pred_fallthru
          _
        // Predicated region
        $region85: #{tpu_custom_call.1} parent=79 // pred_check
          %p595 = pneg %p82
        $region86: #{tpu_custom_call.1} parent=79 // pred_check_branch
          %597 = sbr.rel (%p595) target = $region88
        $region87: #{tpu_custom_call.1} parent=79 // pred_region
          %s598 = sand.u32 %s36, 1
          %s599 = scalar_lea.sflag [#allocation6], %s598
          %s600 = sand.u32 %s72, 1
          %s601 = smul.addr %s600, 8
          %s602 = scalar_lea.vmem [#allocation5], %s601
          %s604 = ssub.s32 128, 128
          %605 = vsyncadd %s599, %s604
          %s606 = smul.addr %s36, 128
          %s607 = scalar_lea.hbm %s1, %s606
          %s609 = sshll.u32 %s602, 4
          %s610 = int_to_ptr.vmem [resolvable:$true] %s609
          %612 = dma.hbm_to_vmem [thread:$0]  %s607, 128, %s610, %s599
        $region88: #{tpu_custom_call.1} parent=79 // pred_fallthru
          _
      $region80: #{tpu_custom_call.1} parent=5 // pred_fallthru
        _
      %p613 = scmp.le.s32.totalorder 1, %s36
      %p614 = scmp.lt.s32.totalorder %s36, 3
      %p615 = pnand %p613, %p614
      %p616 = pneg %p615
      // Predicated region
      $region89: #{tpu_custom_call.1} parent=5 // pred_check
        _
      $region90: #{tpu_custom_call.1} parent=5 // pred_check_branch
        %618 = sbr.rel (%p615) target = $region92
      $region91: #{tpu_custom_call.1} parent=5 // pred_region
        %s619 = ssub.s32 %s36, 1
        %s620 = sand.u32 %s49, 1
        %s621 = scalar_lea.sflag [#allocation3], %s620
        %s622 = sand.u32 %s49, 1
        %s623 = smul.addr %s622, 8
        %s624 = scalar_lea.vmem [#allocation2], %s623
        // Predicated region
        $region93: #{tpu_custom_call.1} parent=91 // pred_check
          %p625 = pneg %p62
        $region94: #{tpu_custom_call.1} parent=91 // pred_check_branch
          %627 = sbr.rel (%p625) target = $region96
        $region95: #{tpu_custom_call.1} parent=91 // pred_region
          %628 = dma.done %s621, 128
        $region96: #{tpu_custom_call.1} parent=91 // pred_fallthru
          _
        %s629 = sand.u32 %s41, 1
        %s630 = scalar_lea.sflag [#allocation6], %s629
        %s631 = sand.u32 %s75, 1
        %s632 = smul.addr %s631, 8
        %s633 = scalar_lea.vmem [#allocation5], %s632
        // Predicated region
        $region97: #{tpu_custom_call.1} parent=91 // pred_check
          %p634 = pneg %p88
        $region98: #{tpu_custom_call.1} parent=91 // pred_check_branch
          %636 = sbr.rel (%p634) target = $region100
        $region99: #{tpu_custom_call.1} parent=91 // pred_region
          %637 = dma.done %s630, 128
        $region100: #{tpu_custom_call.1} parent=91 // pred_fallthru
          _
        // Predicated region
        $region101: #{tpu_custom_call.1} parent=91 // pred_check
          %p638 = pneg %p109
        $region102: #{tpu_custom_call.1} parent=91 // pred_check_branch
          %640 = sbr.rel (%p638) target = $region104
        $region103: #{tpu_custom_call.1} parent=91 // pred_region
          %641 = dma.done [#allocation6], 2048
        $region104: #{tpu_custom_call.1} parent=91 // pred_fallthru
          _
        // Predicated region
        $region105: #{tpu_custom_call.1} parent=91 // pred_check
          %p642 = pneg %p151
        $region106: #{tpu_custom_call.1} parent=91 // pred_check_branch
          %644 = sbr.rel (%p642) target = $region108
        $region107: #{tpu_custom_call.1} parent=91 // pred_region
          %645 = dma.done [#allocation9], 2048
        $region108: #{tpu_custom_call.1} parent=91 // pred_fallthru
          _
        // Predicated region
        $region109: #{tpu_custom_call.1} parent=91 // pred_check
          %p646 = pneg %p193
        $region110: #{tpu_custom_call.1} parent=91 // pred_check_branch
          %648 = sbr.rel (%p646) target = $region112
        $region111: #{tpu_custom_call.1} parent=91 // pred_region
          %649 = dma.done [#allocation9], 2048
        $region112: #{tpu_custom_call.1} parent=91 // pred_fallthru
          _
        // Predicated region
        $region113: #{tpu_custom_call.1} parent=91 // pred_check
          %p650 = pneg %p235
        $region114: #{tpu_custom_call.1} parent=91 // pred_check_branch
          %652 = sbr.rel (%p650) target = $region116
        $region115: #{tpu_custom_call.1} parent=91 // pred_region
          %653 = dma.done [#allocation12], 2048
        $region116: #{tpu_custom_call.1} parent=91 // pred_fallthru
          _
        // Predicated region
        $region117: #{tpu_custom_call.1} parent=91 // pred_check
          %p654 = pneg %p319
        $region118: #{tpu_custom_call.1} parent=91 // pred_check_branch
          %656 = sbr.rel (%p654) target = $region120
        $region119: #{tpu_custom_call.1} parent=91 // pred_region
          %657 = dma.done [#allocation12], 4096
        $region120: #{tpu_custom_call.1} parent=91 // pred_fallthru
          _
        // Predicated region
        $region121: #{tpu_custom_call.1} parent=91 // pred_check
          %p658 = pneg %p361
        $region122: #{tpu_custom_call.1} parent=91 // pred_check_branch
          %660 = sbr.rel (%p658) target = $region124
        $region123: #{tpu_custom_call.1} parent=91 // pred_region
          %661 = dma.done [#allocation15], 4096
        $region124: #{tpu_custom_call.1} parent=91 // pred_fallthru
          _
        %s662 = sand.u32 %s49, 1
        %s663 = scalar_lea.sflag [#allocation3], %s662
        %s664 = sand.u32 %s49, 1
        %s665 = smul.addr %s664, 8
        %s666 = scalar_lea.vmem [#allocation2], %s665
        %p667 = pneg %p62
        %p668 = pneg %p59
        %s669 = sand.u32 %s41, 1
        %s670 = scalar_lea.sflag [#allocation6], %s669
        %s671 = sand.u32 %s75, 1
        %s672 = smul.addr %s671, 8
        %s673 = scalar_lea.vmem [#allocation5], %s672
        %p674 = pneg %p88
        %p675 = pneg %p85
        %p676 = pneg %p109
        %p677 = pneg %p106
        %p678 = pneg %p130
        %p679 = pneg %p127
        %p680 = pneg %p151
        %p681 = pneg %p148
        %p682 = pneg %p172
        %p683 = pneg %p169
        %p684 = pneg %p193
        %p685 = pneg %p190
        %p686 = pneg %p214
        %p687 = pneg %p211
        %p688 = pneg %p235
        %p689 = pneg %p232
        %p690 = pneg %p256
        %p691 = pneg %p253
        %p692 = pneg %p277
        %p693 = pneg %p274
        %p694 = pneg %p298
        %p695 = pneg %p295
        %p696 = pneg %p319
        %p697 = pneg %p316
        %p698 = pneg %p340
        %p699 = pneg %p337
        %p700 = pneg %p361
        %p701 = pneg %p358
        %p702 = pneg %p382
        %p703 = pneg %p379
        %p704 = pneg %p403
        %p705 = pneg %p400
        %p706 = pneg %p424
        %p707 = pneg %p421
        %p708 = pneg %p450
        %p709 = pneg %p447
        %s710 = sand.u32 %s437, 1
        %s711 = scalar_lea.sflag [#allocation4], %s710
        %s712 = sand.u32 %s437, 1
        %s713 = smul.addr %s712, 8
        %s714 = scalar_lea.vmem [#allocation16], %s713
        %v715 = vld [vmem:[%s624] sm:$0xff]
        %v716 = vld [vmem:[%s633] sm:$0xff]
        %v717 = vld [vmem:[#allocation7] sm:$0xff]
        %v718 = vld [vmem:[#allocation7 + $0x8] sm:$0xff]
        %v719 = vld [vmem:[#allocation7 + $0x10] sm:$0xff]
        %v720 = vld [vmem:[#allocation7 + $0x18] sm:$0xff]
        %v721 = vld [vmem:[#allocation7 + $0x20] sm:$0xff]
        %v722 = vld [vmem:[#allocation7 + $0x28] sm:$0xff]
        %v723 = vld [vmem:[#allocation7 + $0x30] sm:$0xff]
        %v724 = vld [vmem:[#allocation7 + $0x38] sm:$0xff]
        %v725 = vld [vmem:[#allocation7 + $0x40] sm:$0xff]
        %v726 = vld [vmem:[#allocation7 + $0x48] sm:$0xff]
        %v727 = vld [vmem:[#allocation7 + $0x50] sm:$0xff]
        %v728 = vld [vmem:[#allocation7 + $0x58] sm:$0xff]
        %v729 = vld [vmem:[#allocation7 + $0x60] sm:$0xff]
        %v730 = vld [vmem:[#allocation7 + $0x68] sm:$0xff]
        %v731 = vld [vmem:[#allocation7 + $0x70] sm:$0xff]
        %v732 = vld [vmem:[#allocation7 + $0x78] sm:$0xff]
        %v733 = vld [vmem:[%s3] sm:$0x1]
        %v735 = vlaneseq
        %v736 = vshrl.u32 %v735, 7
        %v737 = vsub.s32 0, %v736
        %v738 = vrot.slane %v733, %v737
        %740 = vmatprep.subr.mxu0 0.0
        %741 = vmatpush1.msra.mxu0 %v732
        %742 = vmatprep.subr.mxu0 0.0
        %743 = vmatpush1.msra.mxu0 %v731
        %744 = vmatprep.subr.mxu0 0.0
        %745 = vmatpush1.msra.mxu0 %v730
        %746 = vmatprep.subr.mxu0 0.0
        %747 = vmatpush1.msra.mxu0 %v729
        %748 = vmatprep.subr.mxu0 0.0
        %749 = vmatpush1.msra.mxu0 %v728
        %750 = vmatprep.subr.mxu0 0.0
        %751 = vmatpush1.msra.mxu0 %v727
        %752 = vmatprep.subr.mxu0 0.0
        %753 = vmatpush1.msra.mxu0 %v726
        %754 = vmatprep.subr.mxu0 0.0
        %755 = vmatpush1.msra.mxu0 %v725
        %756 = vmatprep.subr.mxu0 0.0
        %757 = vmatpush1.msra.mxu0 %v724
        %758 = vmatprep.subr.mxu0 0.0
        %759 = vmatpush1.msra.mxu0 %v723
        %760 = vmatprep.subr.mxu0 0.0
        %761 = vmatpush1.msra.mxu0 %v722
        %762 = vmatprep.subr.mxu0 0.0
        %763 = vmatpush1.msra.mxu0 %v721
        %764 = vmatprep.subr.mxu0 0.0
        %765 = vmatpush1.msra.mxu0 %v720
        %766 = vmatprep.subr.mxu0 0.0
        %767 = vmatpush1.msra.mxu0 %v719
        %768 = vmatprep.subr.mxu0 0.0
        %769 = vmatpush1.msra.mxu0 %v718
        %770 = vmatprep.subr.mxu0 0.0
        %771 = vmatpush1.msra.mxu0 %v717
        %772 = vmatprep.subr.mxu0 0.0
        %773 = vmatpush2.msra.mxu0 0.0
        %774 = vmatprep.subr.mxu0 0.0
        %775 = vmatpush2.msra.mxu0 0.0
        %776 = vmatprep.subr.mxu0 0.0
        %777 = vmatpush2.msra.mxu0 0.0
        %778 = vmatprep.subr.mxu0 0.0
        %779 = vmatpush2.msra.mxu0 0.0
        %780 = vmatprep.subr.mxu0 0.0
        %781 = vmatpush2.msra.mxu0 0.0
        %782 = vmatprep.subr.mxu0 0.0
        %783 = vmatpush2.msra.mxu0 0.0
        %784 = vmatprep.subr.mxu0 0.0
        %785 = vmatpush2.msra.mxu0 0.0
        %786 = vmatprep.subr.mxu0 0.0
        %787 = vmatpush2.msra.mxu0 0.0
        %788 = vmatprep.subr.mxu0 0.0
        %789 = vmatpush2.msra.mxu0 0.0
        %790 = vmatprep.subr.mxu0 0.0
        %791 = vmatpush2.msra.mxu0 0.0
        %792 = vmatprep.subr.mxu0 0.0
        %793 = vmatpush2.msra.mxu0 0.0
        %794 = vmatprep.subr.mxu0 0.0
        %795 = vmatpush2.msra.mxu0 0.0
        %796 = vmatprep.subr.mxu0 0.0
        %797 = vmatpush2.msra.mxu0 0.0
        %798 = vmatprep.subr.mxu0 0.0
        %799 = vmatpush2.msra.mxu0 0.0
        %800 = vmatprep.subr.mxu0 0.0
        %801 = vmatpush2.msra.mxu0 0.0
        %802 = vmatprep.subr.mxu0 0.0
        %803 = vmatpush2.msra.mxu0 0.0
        %804 = vmatprep.mubr.f32.mxu0 0.0
        %805 = vmatmul.mubr.f32.gmra.mxu0 %v715
        %v806 = vpop.f32.mrf.mxu0
        %v807 = vadd.f32 %v738, %v806
        %v808 = vpop.f32.mrf.mxu0
        %809 = vdwg.mxu0
        %v810 = vld [vmem:[#allocation8] sm:$0xff]
        %v811 = vld [vmem:[#allocation8 + $0x8] sm:$0xff]
        %v812 = vld [vmem:[#allocation8 + $0x10] sm:$0xff]
        %v813 = vld [vmem:[#allocation8 + $0x18] sm:$0xff]
        %v814 = vld [vmem:[#allocation8 + $0x20] sm:$0xff]
        %v815 = vld [vmem:[#allocation8 + $0x28] sm:$0xff]
        %v816 = vld [vmem:[#allocation8 + $0x30] sm:$0xff]
        %v817 = vld [vmem:[#allocation8 + $0x38] sm:$0xff]
        %v818 = vld [vmem:[#allocation8 + $0x40] sm:$0xff]
        %v819 = vld [vmem:[#allocation8 + $0x48] sm:$0xff]
        %v820 = vld [vmem:[#allocation8 + $0x50] sm:$0xff]
        %v821 = vld [vmem:[#allocation8 + $0x58] sm:$0xff]
        %v822 = vld [vmem:[#allocation8 + $0x60] sm:$0xff]
        %v823 = vld [vmem:[#allocation8 + $0x68] sm:$0xff]
        %v824 = vld [vmem:[#allocation8 + $0x70] sm:$0xff]
        %v825 = vld [vmem:[#allocation8 + $0x78] sm:$0xff]
        %v826 = vld [vmem:[%s5] sm:$0x1]
        %v828 = vlaneseq
        %v829 = vshrl.u32 %v828, 7
        %v830 = vsub.s32 0, %v829
        %v831 = vrot.slane %v826, %v830
        %833 = vmatprep.subr.mxu0 0.0
        %834 = vmatpush1.msra.mxu0 %v825
        %835 = vmatprep.subr.mxu0 0.0
        %836 = vmatpush1.msra.mxu0 %v824
        %837 = vmatprep.subr.mxu0 0.0
        %838 = vmatpush1.msra.mxu0 %v823
        %839 = vmatprep.subr.mxu0 0.0
        %840 = vmatpush1.msra.mxu0 %v822
        %841 = vmatprep.subr.mxu0 0.0
        %842 = vmatpush1.msra.mxu0 %v821
        %843 = vmatprep.subr.mxu0 0.0
        %844 = vmatpush1.msra.mxu0 %v820
        %845 = vmatprep.subr.mxu0 0.0
        %846 = vmatpush1.msra.mxu0 %v819
        %847 = vmatprep.subr.mxu0 0.0
        %848 = vmatpush1.msra.mxu0 %v818
        %849 = vmatprep.subr.mxu0 0.0
        %850 = vmatpush1.msra.mxu0 %v817
        %851 = vmatprep.subr.mxu0 0.0
        %852 = vmatpush1.msra.mxu0 %v816
        %853 = vmatprep.subr.mxu0 0.0
        %854 = vmatpush1.msra.mxu0 %v815
        %855 = vmatprep.subr.mxu0 0.0
        %856 = vmatpush1.msra.mxu0 %v814
        %857 = vmatprep.subr.mxu0 0.0
        %858 = vmatpush1.msra.mxu0 %v813
        %859 = vmatprep.subr.mxu0 0.0
        %860 = vmatpush1.msra.mxu0 %v812
        %861 = vmatprep.subr.mxu0 0.0
        %862 = vmatpush1.msra.mxu0 %v811
        %863 = vmatprep.subr.mxu0 0.0
        %864 = vmatpush1.msra.mxu0 %v810
        %865 = vmatprep.subr.mxu0 0.0
        %866 = vmatpush2.msra.mxu0 0.0
        %867 = vmatprep.subr.mxu0 0.0
        %868 = vmatpush2.msra.mxu0 0.0
        %869 = vmatprep.subr.mxu0 0.0
        %870 = vmatpush2.msra.mxu0 0.0
        %871 = vmatprep.subr.mxu0 0.0
        %872 = vmatpush2.msra.mxu0 0.0
        %873 = vmatprep.subr.mxu0 0.0
        %874 = vmatpush2.msra.mxu0 0.0
        %875 = vmatprep.subr.mxu0 0.0
        %876 = vmatpush2.msra.mxu0 0.0
        %877 = vmatprep.subr.mxu0 0.0
        %878 = vmatpush2.msra.mxu0 0.0
        %879 = vmatprep.subr.mxu0 0.0
        %880 = vmatpush2.msra.mxu0 0.0
        %881 = vmatprep.subr.mxu0 0.0
        %882 = vmatpush2.msra.mxu0 0.0
        %883 = vmatprep.subr.mxu0 0.0
        %884 = vmatpush2.msra.mxu0 0.0
        %885 = vmatprep.subr.mxu0 0.0
        %886 = vmatpush2.msra.mxu0 0.0
        %887 = vmatprep.subr.mxu0 0.0
        %888 = vmatpush2.msra.mxu0 0.0
        %889 = vmatprep.subr.mxu0 0.0
        %890 = vmatpush2.msra.mxu0 0.0
        %891 = vmatprep.subr.mxu0 0.0
        %892 = vmatpush2.msra.mxu0 0.0
        %893 = vmatprep.subr.mxu0 0.0
        %894 = vmatpush2.msra.mxu0 0.0
        %895 = vmatprep.subr.mxu0 0.0
        %896 = vmatpush2.msra.mxu0 0.0
        %897 = vmatprep.mubr.f32.mxu0 0.0
        %898 = vmatmul.mubr.f32.gmra.mxu0 %v715
        %v899 = vpop.f32.mrf.mxu0
        %v900 = vadd.f32 %v831, %v899
        %v901 = vpop.f32.mrf.mxu0
        %902 = vdwg.mxu0
        %v903 = vld [vmem:[#allocation10] sm:$0xff]
        %v904 = vld [vmem:[#allocation10 + $0x8] sm:$0xff]
        %v905 = vld [vmem:[#allocation10 + $0x10] sm:$0xff]
        %v906 = vld [vmem:[#allocation10 + $0x18] sm:$0xff]
        %v907 = vld [vmem:[#allocation10 + $0x20] sm:$0xff]
        %v908 = vld [vmem:[#allocation10 + $0x28] sm:$0xff]
        %v909 = vld [vmem:[#allocation10 + $0x30] sm:$0xff]
        %v910 = vld [vmem:[#allocation10 + $0x38] sm:$0xff]
        %v911 = vld [vmem:[#allocation10 + $0x40] sm:$0xff]
        %v912 = vld [vmem:[#allocation10 + $0x48] sm:$0xff]
        %v913 = vld [vmem:[#allocation10 + $0x50] sm:$0xff]
        %v914 = vld [vmem:[#allocation10 + $0x58] sm:$0xff]
        %v915 = vld [vmem:[#allocation10 + $0x60] sm:$0xff]
        %v916 = vld [vmem:[#allocation10 + $0x68] sm:$0xff]
        %v917 = vld [vmem:[#allocation10 + $0x70] sm:$0xff]
        %v918 = vld [vmem:[#allocation10 + $0x78] sm:$0xff]
        %v919 = vld [vmem:[%s7] sm:$0x1]
        %v921 = vlaneseq
        %v922 = vshrl.u32 %v921, 7
        %v923 = vsub.s32 0, %v922
        %v924 = vrot.slane %v919, %v923
        %926 = vmatprep.subr.mxu0 0.0
        %927 = vmatpush1.msra.mxu0 %v918
        %928 = vmatprep.subr.mxu0 0.0
        %929 = vmatpush1.msra.mxu0 %v917
        %930 = vmatprep.subr.mxu0 0.0
        %931 = vmatpush1.msra.mxu0 %v916
        %932 = vmatprep.subr.mxu0 0.0
        %933 = vmatpush1.msra.mxu0 %v915
        %934 = vmatprep.subr.mxu0 0.0
        %935 = vmatpush1.msra.mxu0 %v914
        %936 = vmatprep.subr.mxu0 0.0
        %937 = vmatpush1.msra.mxu0 %v913
        %938 = vmatprep.subr.mxu0 0.0
        %939 = vmatpush1.msra.mxu0 %v912
        %940 = vmatprep.subr.mxu0 0.0
        %941 = vmatpush1.msra.mxu0 %v911
        %942 = vmatprep.subr.mxu0 0.0
        %943 = vmatpush1.msra.mxu0 %v910
        %944 = vmatprep.subr.mxu0 0.0
        %945 = vmatpush1.msra.mxu0 %v909
        %946 = vmatprep.subr.mxu0 0.0
        %947 = vmatpush1.msra.mxu0 %v908
        %948 = vmatprep.subr.mxu0 0.0
        %949 = vmatpush1.msra.mxu0 %v907
        %950 = vmatprep.subr.mxu0 0.0
        %951 = vmatpush1.msra.mxu0 %v906
        %952 = vmatprep.subr.mxu0 0.0
        %953 = vmatpush1.msra.mxu0 %v905
        %954 = vmatprep.subr.mxu0 0.0
        %955 = vmatpush1.msra.mxu0 %v904
        %956 = vmatprep.subr.mxu0 0.0
        %957 = vmatpush1.msra.mxu0 %v903
        %958 = vmatprep.subr.mxu0 0.0
        %959 = vmatpush2.msra.mxu0 0.0
        %960 = vmatprep.subr.mxu0 0.0
        %961 = vmatpush2.msra.mxu0 0.0
        %962 = vmatprep.subr.mxu0 0.0
        %963 = vmatpush2.msra.mxu0 0.0
        %964 = vmatprep.subr.mxu0 0.0
        %965 = vmatpush2.msra.mxu0 0.0
        %966 = vmatprep.subr.mxu0 0.0
        %967 = vmatpush2.msra.mxu0 0.0
        %968 = vmatprep.subr.mxu0 0.0
        %969 = vmatpush2.msra.mxu0 0.0
        %970 = vmatprep.subr.mxu0 0.0
        %971 = vmatpush2.msra.mxu0 0.0
        %972 = vmatprep.subr.mxu0 0.0
        %973 = vmatpush2.msra.mxu0 0.0
        %974 = vmatprep.subr.mxu0 0.0
        %975 = vmatpush2.msra.mxu0 0.0
        %976 = vmatprep.subr.mxu0 0.0
        %977 = vmatpush2.msra.mxu0 0.0
        %978 = vmatprep.subr.mxu0 0.0
        %979 = vmatpush2.msra.mxu0 0.0
        %980 = vmatprep.subr.mxu0 0.0
        %981 = vmatpush2.msra.mxu0 0.0
        %982 = vmatprep.subr.mxu0 0.0
        %983 = vmatpush2.msra.mxu0 0.0
        %984 = vmatprep.subr.mxu0 0.0
        %985 = vmatpush2.msra.mxu0 0.0
        %986 = vmatprep.subr.mxu0 0.0
        %987 = vmatpush2.msra.mxu0 0.0
        %988 = vmatprep.subr.mxu0 0.0
        %989 = vmatpush2.msra.mxu0 0.0
        %990 = vmatprep.mubr.f32.mxu0 0.0
        %991 = vmatmul.mubr.f32.gmra.mxu0 %v715
        %v992 = vpop.f32.mrf.mxu0
        %v993 = vadd.f32 %v924, %v992
        %v994 = vpop.f32.mrf.mxu0
        %995 = vdwg.mxu0
        %v996 = vmul.f32 %v807, 0.17677669
        %vm997 = vcmp.gt.f32.partialorder %v716, 0.0
        %v998 = vsel %vm997, 0.0, -1e+30
        %vm999 = vcmask 261120
        %v1001 = vsel %vm999, %v996, 0
        %v1004 = vsel %vm999, %v900, 0
        %1006 = vmatprep.subr.mxu0 0.0
        %1007 = vmatpush1.xpose.msra.mxu0 0.0
        %1008 = vmatprep.subr.mxu0 0.0
        %1009 = vmatpush1.xpose.msra.mxu0 0.0
        %1010 = vmatprep.subr.mxu0 0.0
        %1011 = vmatpush1.xpose.msra.mxu0 0.0
        %1012 = vmatprep.subr.mxu0 0.0
        %1013 = vmatpush1.xpose.msra.mxu0 0.0
        %1014 = vmatprep.subr.mxu0 0.0
        %1015 = vmatpush1.xpose.msra.mxu0 0.0
        %1016 = vmatprep.subr.mxu0 0.0
        %1017 = vmatpush1.xpose.msra.mxu0 0.0
        %1018 = vmatprep.subr.mxu0 0.0
        %1019 = vmatpush1.xpose.msra.mxu0 0.0
        %1020 = vmatprep.subr.mxu0 0.0
        %1021 = vmatpush1.xpose.msra.mxu0 0.0
        %1022 = vmatprep.subr.mxu0 0.0
        %1023 = vmatpush1.xpose.msra.mxu0 0.0
        %1024 = vmatprep.subr.mxu0 0.0
        %1025 = vmatpush1.xpose.msra.mxu0 0.0
        %1026 = vmatprep.subr.mxu0 0.0
        %1027 = vmatpush1.xpose.msra.mxu0 0.0
        %1028 = vmatprep.subr.mxu0 0.0
        %1029 = vmatpush1.xpose.msra.mxu0 0.0
        %1030 = vmatprep.subr.mxu0 0.0
        %1031 = vmatpush1.xpose.msra.mxu0 0.0
        %1032 = vmatprep.subr.mxu0 0.0
        %1033 = vmatpush1.xpose.msra.mxu0 0.0
        %1034 = vmatprep.subr.mxu0 0.0
        %1035 = vmatpush1.xpose.msra.mxu0 0.0
        %1036 = vmatprep.subr.mxu0 0.0
        %1037 = vmatpush1.xpose.msra.mxu0 %v1004
        %1038 = vmatprep.subr.mxu0 0.0
        %1039 = vmatpush2.xpose.msra.mxu0 0.0
        %1040 = vmatprep.subr.mxu0 0.0
        %1041 = vmatpush2.xpose.msra.mxu0 0.0
        %1042 = vmatprep.subr.mxu0 0.0
        %1043 = vmatpush2.xpose.msra.mxu0 0.0
        %1044 = vmatprep.subr.mxu0 0.0
        %1045 = vmatpush2.xpose.msra.mxu0 0.0
        %1046 = vmatprep.subr.mxu0 0.0
        %1047 = vmatpush2.xpose.msra.mxu0 0.0
        %1048 = vmatprep.subr.mxu0 0.0
        %1049 = vmatpush2.xpose.msra.mxu0 0.0
        %1050 = vmatprep.subr.mxu0 0.0
        %1051 = vmatpush2.xpose.msra.mxu0 0.0
        %1052 = vmatprep.subr.mxu0 0.0
        %1053 = vmatpush2.xpose.msra.mxu0 0.0
        %1054 = vmatprep.subr.mxu0 0.0
        %1055 = vmatpush2.xpose.msra.mxu0 0.0
        %1056 = vmatprep.subr.mxu0 0.0
        %1057 = vmatpush2.xpose.msra.mxu0 0.0
        %1058 = vmatprep.subr.mxu0 0.0
        %1059 = vmatpush2.xpose.msra.mxu0 0.0
        %1060 = vmatprep.subr.mxu0 0.0
        %1061 = vmatpush2.xpose.msra.mxu0 0.0
        %1062 = vmatprep.subr.mxu0 0.0
        %1063 = vmatpush2.xpose.msra.mxu0 0.0
        %1064 = vmatprep.subr.mxu0 0.0
        %1065 = vmatpush2.xpose.msra.mxu0 0.0
        %1066 = vmatprep.subr.mxu0 0.0
        %1067 = vmatpush2.xpose.msra.mxu0 0.0
        %1068 = vmatprep.subr.mxu0 0.0
        %1069 = vmatpush2.xpose.msra.mxu0 0.0
        %1070 = vmatprep.mubr.f32.mxu0 0.0
        %1071 = vmatmul.mubr.f32.gmra.mxu0 %v1001
        %v1072 = vpop.f32.mrf.mxu0
        %v1073 = vadd.f32 %v998, %v1072
        %v1074 = vpop.f32.mrf.mxu0
        %1075 = vdwg.mxu0
        %vm1076 = vcmask 64512
        %v1077 = vsel %vm1076, %v1073, -inf
        %1078 = vmax.xlane.f32.xlu0 %v1077
        %v1079 = vpop.xlane.xlu0 %1078
        %v1080 = vsub.f32 %v1073, %v1079
        %v1081 = vmul.f32 %v1080, 1.442695
        %v1082 = vpow.pop %v1081
        %v1083 = vsel %vm1076, %v1082, 0.0
        %1084 = vadd.xlane.f32.xlu0 %v1083
        %v1085 = vpop.xlane.xlu0 %1084
        %v1086 = vrcp.pop %v1085
        %v1087 = vmul.f32 %v1082, %v1086
        %v1089 = vsel %vm1076, %v1087, 0
        %1091 = vmatprep.subr.mxu0 0.0
        %1092 = vmatpush1.msra.mxu0 0.0
        %1093 = vmatprep.subr.mxu0 0.0
        %1094 = vmatpush1.msra.mxu0 0.0
        %1095 = vmatprep.subr.mxu0 0.0
        %1096 = vmatpush1.msra.mxu0 0.0
        %1097 = vmatprep.subr.mxu0 0.0
        %1098 = vmatpush1.msra.mxu0 0.0
        %1099 = vmatprep.subr.mxu0 0.0
        %1100 = vmatpush1.msra.mxu0 0.0
        %1101 = vmatprep.subr.mxu0 0.0
        %1102 = vmatpush1.msra.mxu0 0.0
        %1103 = vmatprep.subr.mxu0 0.0
        %1104 = vmatpush1.msra.mxu0 0.0
        %1105 = vmatprep.subr.mxu0 0.0
        %1106 = vmatpush1.msra.mxu0 0.0
        %1107 = vmatprep.subr.mxu0 0.0
        %1108 = vmatpush1.msra.mxu0 0.0
        %1109 = vmatprep.subr.mxu0 0.0
        %1110 = vmatpush1.msra.mxu0 0.0
        %1111 = vmatprep.subr.mxu0 0.0
        %1112 = vmatpush1.msra.mxu0 0.0
        %1113 = vmatprep.subr.mxu0 0.0
        %1114 = vmatpush1.msra.mxu0 0.0
        %1115 = vmatprep.subr.mxu0 0.0
        %1116 = vmatpush1.msra.mxu0 0.0
        %1117 = vmatprep.subr.mxu0 0.0
        %1118 = vmatpush1.msra.mxu0 0.0
        %1119 = vmatprep.subr.mxu0 0.0
        %1120 = vmatpush1.msra.mxu0 0.0
        %1121 = vmatprep.subr.mxu0 0.0
        %1122 = vmatpush1.msra.mxu0 %v993
        %1123 = vmatprep.subr.mxu0 0.0
        %1124 = vmatpush2.msra.mxu0 0.0
        %1125 = vmatprep.subr.mxu0 0.0
        %1126 = vmatpush2.msra.mxu0 0.0
        %1127 = vmatprep.subr.mxu0 0.0
        %1128 = vmatpush2.msra.mxu0 0.0
        %1129 = vmatprep.subr.mxu0 0.0
        %1130 = vmatpush2.msra.mxu0 0.0
        %1131 = vmatprep.subr.mxu0 0.0
        %1132 = vmatpush2.msra.mxu0 0.0
        %1133 = vmatprep.subr.mxu0 0.0
        %1134 = vmatpush2.msra.mxu0 0.0
        %1135 = vmatprep.subr.mxu0 0.0
        %1136 = vmatpush2.msra.mxu0 0.0
        %1137 = vmatprep.subr.mxu0 0.0
        %1138 = vmatpush2.msra.mxu0 0.0
        %1139 = vmatprep.subr.mxu0 0.0
        %1140 = vmatpush2.msra.mxu0 0.0
        %1141 = vmatprep.subr.mxu0 0.0
        %1142 = vmatpush2.msra.mxu0 0.0
        %1143 = vmatprep.subr.mxu0 0.0
        %1144 = vmatpush2.msra.mxu0 0.0
        %1145 = vmatprep.subr.mxu0 0.0
        %1146 = vmatpush2.msra.mxu0 0.0
        %1147 = vmatprep.subr.mxu0 0.0
        %1148 = vmatpush2.msra.mxu0 0.0
        %1149 = vmatprep.subr.mxu0 0.0
        %1150 = vmatpush2.msra.mxu0 0.0
        %1151 = vmatprep.subr.mxu0 0.0
        %1152 = vmatpush2.msra.mxu0 0.0
        %1153 = vmatprep.subr.mxu0 0.0
        %1154 = vmatpush2.msra.mxu0 0.0
        %1155 = vmatprep.mubr.f32.mxu0 0.0
        %1156 = vmatmul.mubr.f32.gmra.mxu0 %v1089
        %v1157 = vpop.f32.mrf.mxu0
        %v1158 = vadd.f32 0.0, %v1157
        %v1159 = vpop.f32.mrf.mxu0
        %1160 = vdwg.mxu0
        %1161 = vrot.lane.b32.xlu0 %v996, 96
        %v1162 = vpop.permute.xlu0 %1161
        %1163 = vrot.lane.b32.xlu0 %v900, 96
        %v1164 = vpop.permute.xlu0 %1163
        %v1165 = vsel %vm999, %v1162, 0
        %v1167 = vsel %vm999, %v1164, 0
        %1169 = vmatprep.subr.mxu0 0.0
        %1170 = vmatpush1.xpose.msra.mxu0 0.0
        %1171 = vmatprep.subr.mxu0 0.0
        %1172 = vmatpush1.xpose.msra.mxu0 0.0
        %1173 = vmatprep.subr.mxu0 0.0
        %1174 = vmatpush1.xpose.msra.mxu0 0.0
        %1175 = vmatprep.subr.mxu0 0.0
        %1176 = vmatpush1.xpose.msra.mxu0 0.0
        %1177 = vmatprep.subr.mxu0 0.0
        %1178 = vmatpush1.xpose.msra.mxu0 0.0
        %1179 = vmatprep.subr.mxu0 0.0
        %1180 = vmatpush1.xpose.msra.mxu0 0.0
        %1181 = vmatprep.subr.mxu0 0.0
        %1182 = vmatpush1.xpose.msra.mxu0 0.0
        %1183 = vmatprep.subr.mxu0 0.0
        %1184 = vmatpush1.xpose.msra.mxu0 0.0
        %1185 = vmatprep.subr.mxu0 0.0
        %1186 = vmatpush1.xpose.msra.mxu0 0.0
        %1187 = vmatprep.subr.mxu0 0.0
        %1188 = vmatpush1.xpose.msra.mxu0 0.0
        %1189 = vmatprep.subr.mxu0 0.0
        %1190 = vmatpush1.xpose.msra.mxu0 0.0
        %1191 = vmatprep.subr.mxu0 0.0
        %1192 = vmatpush1.xpose.msra.mxu0 0.0
        %1193 = vmatprep.subr.mxu0 0.0
        %1194 = vmatpush1.xpose.msra.mxu0 0.0
        %1195 = vmatprep.subr.mxu0 0.0
        %1196 = vmatpush1.xpose.msra.mxu0 0.0
        %1197 = vmatprep.subr.mxu0 0.0
        %1198 = vmatpush1.xpose.msra.mxu0 0.0
        %1199 = vmatprep.subr.mxu0 0.0
        %1200 = vmatpush1.xpose.msra.mxu0 %v1167
        %1201 = vmatprep.subr.mxu0 0.0
        %1202 = vmatpush2.xpose.msra.mxu0 0.0
        %1203 = vmatprep.subr.mxu0 0.0
        %1204 = vmatpush2.xpose.msra.mxu0 0.0
        %1205 = vmatprep.subr.mxu0 0.0
        %1206 = vmatpush2.xpose.msra.mxu0 0.0
        %1207 = vmatprep.subr.mxu0 0.0
        %1208 = vmatpush2.xpose.msra.mxu0 0.0
        %1209 = vmatprep.subr.mxu0 0.0
        %1210 = vmatpush2.xpose.msra.mxu0 0.0
        %1211 = vmatprep.subr.mxu0 0.0
        %1212 = vmatpush2.xpose.msra.mxu0 0.0
        %1213 = vmatprep.subr.mxu0 0.0
        %1214 = vmatpush2.xpose.msra.mxu0 0.0
        %1215 = vmatprep.subr.mxu0 0.0
        %1216 = vmatpush2.xpose.msra.mxu0 0.0
        %1217 = vmatprep.subr.mxu0 0.0
        %1218 = vmatpush2.xpose.msra.mxu0 0.0
        %1219 = vmatprep.subr.mxu0 0.0
        %1220 = vmatpush2.xpose.msra.mxu0 0.0
        %1221 = vmatprep.subr.mxu0 0.0
        %1222 = vmatpush2.xpose.msra.mxu0 0.0
        %1223 = vmatprep.subr.mxu0 0.0
        %1224 = vmatpush2.xpose.msra.mxu0 0.0
        %1225 = vmatprep.subr.mxu0 0.0
        %1226 = vmatpush2.xpose.msra.mxu0 0.0
        %1227 = vmatprep.subr.mxu0 0.0
        %1228 = vmatpush2.xpose.msra.mxu0 0.0
        %1229 = vmatprep.subr.mxu0 0.0
        %1230 = vmatpush2.xpose.msra.mxu0 0.0
        %1231 = vmatprep.subr.mxu0 0.0
        %1232 = vmatpush2.xpose.msra.mxu0 0.0
        %1233 = vmatprep.mubr.f32.mxu0 0.0
        %1234 = vmatmul.mubr.f32.gmra.mxu0 %v1165
        %v1235 = vpop.f32.mrf.mxu0
        %v1236 = vadd.f32 %v998, %v1235
        %v1237 = vpop.f32.mrf.mxu0
        %1238 = vdwg.mxu0
        %v1239 = vsel %vm1076, %v1236, -inf
        %1240 = vmax.xlane.f32.xlu0 %v1239
        %v1241 = vpop.xlane.xlu0 %1240
        %v1242 = vsub.f32 %v1236, %v1241
        %v1243 = vmul.f32 %v1242, 1.442695
        %v1244 = vpow.pop %v1243
        %v1245 = vsel %vm1076, %v1244, 0.0
        %1246 = vadd.xlane.f32.xlu0 %v1245
        %v1247 = vpop.xlane.xlu0 %1246
        %v1248 = vrcp.pop %v1247
        %v1249 = vmul.f32 %v1244, %v1248
        %1251 = vrot.lane.b32.xlu0 %v993, 96
        %v1252 = vpop.permute.xlu0 %1251
        %v1255 = vsel %vm1076, %v1249, 0
        %1257 = vmatprep.subr.mxu0 0.0
        %1258 = vmatpush1.msra.mxu0 0.0
        %1259 = vmatprep.subr.mxu0 0.0
        %1260 = vmatpush1.msra.mxu0 0.0
        %1261 = vmatprep.subr.mxu0 0.0
        %1262 = vmatpush1.msra.mxu0 0.0
        %1263 = vmatprep.subr.mxu0 0.0
        %1264 = vmatpush1.msra.mxu0 0.0
        %1265 = vmatprep.subr.mxu0 0.0
        %1266 = vmatpush1.msra.mxu0 0.0
        %1267 = vmatprep.subr.mxu0 0.0
        %1268 = vmatpush1.msra.mxu0 0.0
        %1269 = vmatprep.subr.mxu0 0.0
        %1270 = vmatpush1.msra.mxu0 0.0
        %1271 = vmatprep.subr.mxu0 0.0
        %1272 = vmatpush1.msra.mxu0 0.0
        %1273 = vmatprep.subr.mxu0 0.0
        %1274 = vmatpush1.msra.mxu0 0.0
        %1275 = vmatprep.subr.mxu0 0.0
        %1276 = vmatpush1.msra.mxu0 0.0
        %1277 = vmatprep.subr.mxu0 0.0
        %1278 = vmatpush1.msra.mxu0 0.0
        %1279 = vmatprep.subr.mxu0 0.0
        %1280 = vmatpush1.msra.mxu0 0.0
        %1281 = vmatprep.subr.mxu0 0.0
        %1282 = vmatpush1.msra.mxu0 0.0
        %1283 = vmatprep.subr.mxu0 0.0
        %1284 = vmatpush1.msra.mxu0 0.0
        %1285 = vmatprep.subr.mxu0 0.0
        %1286 = vmatpush1.msra.mxu0 0.0
        %1287 = vmatprep.subr.mxu0 0.0
        %1288 = vmatpush1.msra.mxu0 %v1252
        %1289 = vmatprep.subr.mxu0 0.0
        %1290 = vmatpush2.msra.mxu0 0.0
        %1291 = vmatprep.subr.mxu0 0.0
        %1292 = vmatpush2.msra.mxu0 0.0
        %1293 = vmatprep.subr.mxu0 0.0
        %1294 = vmatpush2.msra.mxu0 0.0
        %1295 = vmatprep.subr.mxu0 0.0
        %1296 = vmatpush2.msra.mxu0 0.0
        %1297 = vmatprep.subr.mxu0 0.0
        %1298 = vmatpush2.msra.mxu0 0.0
        %1299 = vmatprep.subr.mxu0 0.0
        %1300 = vmatpush2.msra.mxu0 0.0
        %1301 = vmatprep.subr.mxu0 0.0
        %1302 = vmatpush2.msra.mxu0 0.0
        %1303 = vmatprep.subr.mxu0 0.0
        %1304 = vmatpush2.msra.mxu0 0.0
        %1305 = vmatprep.subr.mxu0 0.0
        %1306 = vmatpush2.msra.mxu0 0.0
        %1307 = vmatprep.subr.mxu0 0.0
        %1308 = vmatpush2.msra.mxu0 0.0
        %1309 = vmatprep.subr.mxu0 0.0
        %1310 = vmatpush2.msra.mxu0 0.0
        %1311 = vmatprep.subr.mxu0 0.0
        %1312 = vmatpush2.msra.mxu0 0.0
        %1313 = vmatprep.subr.mxu0 0.0
        %1314 = vmatpush2.msra.mxu0 0.0
        %1315 = vmatprep.subr.mxu0 0.0
        %1316 = vmatpush2.msra.mxu0 0.0
        %1317 = vmatprep.subr.mxu0 0.0
        %1318 = vmatpush2.msra.mxu0 0.0
        %1319 = vmatprep.subr.mxu0 0.0
        %1320 = vmatpush2.msra.mxu0 0.0
        %1321 = vmatprep.mubr.f32.mxu0 0.0
        %1322 = vmatmul.mubr.f32.gmra.mxu0 %v1255
        %v1323 = vpop.f32.mrf.mxu0
        %v1324 = vadd.f32 0.0, %v1323
        %v1325 = vpop.f32.mrf.mxu0
        %1326 = vdwg.mxu0
        %1327 = vrot.lane.b32.xlu0 %v996, 64
        %v1328 = vpop.permute.xlu0 %1327
        %1329 = vrot.lane.b32.xlu0 %v900, 64
        %v1330 = vpop.permute.xlu0 %1329
        %v1331 = vsel %vm999, %v1328, 0
        %v1333 = vsel %vm999, %v1330, 0
        %1335 = vmatprep.subr.mxu0 0.0
        %1336 = vmatpush1.xpose.msra.mxu0 0.0
        %1337 = vmatprep.subr.mxu0 0.0
        %1338 = vmatpush1.xpose.msra.mxu0 0.0
        %1339 = vmatprep.subr.mxu0 0.0
        %1340 = vmatpush1.xpose.msra.mxu0 0.0
        %1341 = vmatprep.subr.mxu0 0.0
        %1342 = vmatpush1.xpose.msra.mxu0 0.0
        %1343 = vmatprep.subr.mxu0 0.0
        %1344 = vmatpush1.xpose.msra.mxu0 0.0
        %1345 = vmatprep.subr.mxu0 0.0
        %1346 = vmatpush1.xpose.msra.mxu0 0.0
        %1347 = vmatprep.subr.mxu0 0.0
        %1348 = vmatpush1.xpose.msra.mxu0 0.0
        %1349 = vmatprep.subr.mxu0 0.0
        %1350 = vmatpush1.xpose.msra.mxu0 0.0
        %1351 = vmatprep.subr.mxu0 0.0
        %1352 = vmatpush1.xpose.msra.mxu0 0.0
        %1353 = vmatprep.subr.mxu0 0.0
        %1354 = vmatpush1.xpose.msra.mxu0 0.0
        %1355 = vmatprep.subr.mxu0 0.0
        %1356 = vmatpush1.xpose.msra.mxu0 0.0
        %1357 = vmatprep.subr.mxu0 0.0
        %1358 = vmatpush1.xpose.msra.mxu0 0.0
        %1359 = vmatprep.subr.mxu0 0.0
        %1360 = vmatpush1.xpose.msra.mxu0 0.0
        %1361 = vmatprep.subr.mxu0 0.0
        %1362 = vmatpush1.xpose.msra.mxu0 0.0
        %1363 = vmatprep.subr.mxu0 0.0
        %1364 = vmatpush1.xpose.msra.mxu0 0.0
        %1365 = vmatprep.subr.mxu0 0.0
        %1366 = vmatpush1.xpose.msra.mxu0 %v1333
        %1367 = vmatprep.subr.mxu0 0.0
        %1368 = vmatpush2.xpose.msra.mxu0 0.0
        %1369 = vmatprep.subr.mxu0 0.0
        %1370 = vmatpush2.xpose.msra.mxu0 0.0
        %1371 = vmatprep.subr.mxu0 0.0
        %1372 = vmatpush2.xpose.msra.mxu0 0.0
        %1373 = vmatprep.subr.mxu0 0.0
        %1374 = vmatpush2.xpose.msra.mxu0 0.0
        %1375 = vmatprep.subr.mxu0 0.0
        %1376 = vmatpush2.xpose.msra.mxu0 0.0
        %1377 = vmatprep.subr.mxu0 0.0
        %1378 = vmatpush2.xpose.msra.mxu0 0.0
        %1379 = vmatprep.subr.mxu0 0.0
        %1380 = vmatpush2.xpose.msra.mxu0 0.0
        %1381 = vmatprep.subr.mxu0 0.0
        %1382 = vmatpush2.xpose.msra.mxu0 0.0
        %1383 = vmatprep.subr.mxu0 0.0
        %1384 = vmatpush2.xpose.msra.mxu0 0.0
        %1385 = vmatprep.subr.mxu0 0.0
        %1386 = vmatpush2.xpose.msra.mxu0 0.0
        %1387 = vmatprep.subr.mxu0 0.0
        %1388 = vmatpush2.xpose.msra.mxu0 0.0
        %1389 = vmatprep.subr.mxu0 0.0
        %1390 = vmatpush2.xpose.msra.mxu0 0.0
        %1391 = vmatprep.subr.mxu0 0.0
        %1392 = vmatpush2.xpose.msra.mxu0 0.0
        %1393 = vmatprep.subr.mxu0 0.0
        %1394 = vmatpush2.xpose.msra.mxu0 0.0
        %1395 = vmatprep.subr.mxu0 0.0
        %1396 = vmatpush2.xpose.msra.mxu0 0.0
        %1397 = vmatprep.subr.mxu0 0.0
        %1398 = vmatpush2.xpose.msra.mxu0 0.0
        %1399 = vmatprep.mubr.f32.mxu0 0.0
        %1400 = vmatmul.mubr.f32.gmra.mxu0 %v1331
        %v1401 = vpop.f32.mrf.mxu0
        %v1402 = vadd.f32 %v998, %v1401
        %v1403 = vpop.f32.mrf.mxu0
        %1404 = vdwg.mxu0
        %v1405 = vsel %vm1076, %v1402, -inf
        %1406 = vmax.xlane.f32.xlu0 %v1405
        %v1407 = vpop.xlane.xlu0 %1406
        %v1408 = vsub.f32 %v1402, %v1407
        %v1409 = vmul.f32 %v1408, 1.442695
        %v1410 = vpow.pop %v1409
        %v1411 = vsel %vm1076, %v1410, 0.0
        %1412 = vadd.xlane.f32.xlu0 %v1411
        %v1413 = vpop.xlane.xlu0 %1412
        %v1414 = vrcp.pop %v1413
        %v1415 = vmul.f32 %v1410, %v1414
        %1416 = vrot.lane.b32.xlu0 %v993, 64
        %v1417 = vpop.permute.xlu0 %1416
        %v1420 = vsel %vm1076, %v1415, 0
        %1422 = vmatprep.subr.mxu0 0.0
        %1423 = vmatpush1.msra.mxu0 0.0
        %1424 = vmatprep.subr.mxu0 0.0
        %1425 = vmatpush1.msra.mxu0 0.0
        %1426 = vmatprep.subr.mxu0 0.0
        %1427 = vmatpush1.msra.mxu0 0.0
        %1428 = vmatprep.subr.mxu0 0.0
        %1429 = vmatpush1.msra.mxu0 0.0
        %1430 = vmatprep.subr.mxu0 0.0
        %1431 = vmatpush1.msra.mxu0 0.0
        %1432 = vmatprep.subr.mxu0 0.0
        %1433 = vmatpush1.msra.mxu0 0.0
        %1434 = vmatprep.subr.mxu0 0.0
        %1435 = vmatpush1.msra.mxu0 0.0
        %1436 = vmatprep.subr.mxu0 0.0
        %1437 = vmatpush1.msra.mxu0 0.0
        %1438 = vmatprep.subr.mxu0 0.0
        %1439 = vmatpush1.msra.mxu0 0.0
        %1440 = vmatprep.subr.mxu0 0.0
        %1441 = vmatpush1.msra.mxu0 0.0
        %1442 = vmatprep.subr.mxu0 0.0
        %1443 = vmatpush1.msra.mxu0 0.0
        %1444 = vmatprep.subr.mxu0 0.0
        %1445 = vmatpush1.msra.mxu0 0.0
        %1446 = vmatprep.subr.mxu0 0.0
        %1447 = vmatpush1.msra.mxu0 0.0
        %1448 = vmatprep.subr.mxu0 0.0
        %1449 = vmatpush1.msra.mxu0 0.0
        %1450 = vmatprep.subr.mxu0 0.0
        %1451 = vmatpush1.msra.mxu0 0.0
        %1452 = vmatprep.subr.mxu0 0.0
        %1453 = vmatpush1.msra.mxu0 %v1417
        %1454 = vmatprep.subr.mxu0 0.0
        %1455 = vmatpush2.msra.mxu0 0.0
        %1456 = vmatprep.subr.mxu0 0.0
        %1457 = vmatpush2.msra.mxu0 0.0
        %1458 = vmatprep.subr.mxu0 0.0
        %1459 = vmatpush2.msra.mxu0 0.0
        %1460 = vmatprep.subr.mxu0 0.0
        %1461 = vmatpush2.msra.mxu0 0.0
        %1462 = vmatprep.subr.mxu0 0.0
        %1463 = vmatpush2.msra.mxu0 0.0
        %1464 = vmatprep.subr.mxu0 0.0
        %1465 = vmatpush2.msra.mxu0 0.0
        %1466 = vmatprep.subr.mxu0 0.0
        %1467 = vmatpush2.msra.mxu0 0.0
        %1468 = vmatprep.subr.mxu0 0.0
        %1469 = vmatpush2.msra.mxu0 0.0
        %1470 = vmatprep.subr.mxu0 0.0
        %1471 = vmatpush2.msra.mxu0 0.0
        %1472 = vmatprep.subr.mxu0 0.0
        %1473 = vmatpush2.msra.mxu0 0.0
        %1474 = vmatprep.subr.mxu0 0.0
        %1475 = vmatpush2.msra.mxu0 0.0
        %1476 = vmatprep.subr.mxu0 0.0
        %1477 = vmatpush2.msra.mxu0 0.0
        %1478 = vmatprep.subr.mxu0 0.0
        %1479 = vmatpush2.msra.mxu0 0.0
        %1480 = vmatprep.subr.mxu0 0.0
        %1481 = vmatpush2.msra.mxu0 0.0
        %1482 = vmatprep.subr.mxu0 0.0
        %1483 = vmatpush2.msra.mxu0 0.0
        %1484 = vmatprep.subr.mxu0 0.0
        %1485 = vmatpush2.msra.mxu0 0.0
        %1486 = vmatprep.mubr.f32.mxu0 0.0
        %1487 = vmatmul.mubr.f32.gmra.mxu0 %v1420
        %v1488 = vpop.f32.mrf.mxu0
        %v1489 = vadd.f32 0.0, %v1488
        %v1490 = vpop.f32.mrf.mxu0
        %1491 = vdwg.mxu0
        %1492 = vrot.lane.b32.xlu0 %v996, 32
        %v1493 = vpop.permute.xlu0 %1492
        %1494 = vrot.lane.b32.xlu0 %v900, 32
        %v1495 = vpop.permute.xlu0 %1494
        %v1496 = vsel %vm999, %v1493, 0
        %v1498 = vsel %vm999, %v1495, 0
        %1500 = vmatprep.subr.mxu0 0.0
        %1501 = vmatpush1.xpose.msra.mxu0 0.0
        %1502 = vmatprep.subr.mxu0 0.0
        %1503 = vmatpush1.xpose.msra.mxu0 0.0
        %1504 = vmatprep.subr.mxu0 0.0
        %1505 = vmatpush1.xpose.msra.mxu0 0.0
        %1506 = vmatprep.subr.mxu0 0.0
        %1507 = vmatpush1.xpose.msra.mxu0 0.0
        %1508 = vmatprep.subr.mxu0 0.0
        %1509 = vmatpush1.xpose.msra.mxu0 0.0
        %1510 = vmatprep.subr.mxu0 0.0
        %1511 = vmatpush1.xpose.msra.mxu0 0.0
        %1512 = vmatprep.subr.mxu0 0.0
        %1513 = vmatpush1.xpose.msra.mxu0 0.0
        %1514 = vmatprep.subr.mxu0 0.0
        %1515 = vmatpush1.xpose.msra.mxu0 0.0
        %1516 = vmatprep.subr.mxu0 0.0
        %1517 = vmatpush1.xpose.msra.mxu0 0.0
        %1518 = vmatprep.subr.mxu0 0.0
        %1519 = vmatpush1.xpose.msra.mxu0 0.0
        %1520 = vmatprep.subr.mxu0 0.0
        %1521 = vmatpush1.xpose.msra.mxu0 0.0
        %1522 = vmatprep.subr.mxu0 0.0
        %1523 = vmatpush1.xpose.msra.mxu0 0.0
        %1524 = vmatprep.subr.mxu0 0.0
        %1525 = vmatpush1.xpose.msra.mxu0 0.0
        %1526 = vmatprep.subr.mxu0 0.0
        %1527 = vmatpush1.xpose.msra.mxu0 0.0
        %1528 = vmatprep.subr.mxu0 0.0
        %1529 = vmatpush1.xpose.msra.mxu0 0.0
        %1530 = vmatprep.subr.mxu0 0.0
        %1531 = vmatpush1.xpose.msra.mxu0 %v1498
        %1532 = vmatprep.subr.mxu0 0.0
        %1533 = vmatpush2.xpose.msra.mxu0 0.0
        %1534 = vmatprep.subr.mxu0 0.0
        %1535 = vmatpush2.xpose.msra.mxu0 0.0
        %1536 = vmatprep.subr.mxu0 0.0
        %1537 = vmatpush2.xpose.msra.mxu0 0.0
        %1538 = vmatprep.subr.mxu0 0.0
        %1539 = vmatpush2.xpose.msra.mxu0 0.0
        %1540 = vmatprep.subr.mxu0 0.0
        %1541 = vmatpush2.xpose.msra.mxu0 0.0
        %1542 = vmatprep.subr.mxu0 0.0
        %1543 = vmatpush2.xpose.msra.mxu0 0.0
        %1544 = vmatprep.subr.mxu0 0.0
        %1545 = vmatpush2.xpose.msra.mxu0 0.0
        %1546 = vmatprep.subr.mxu0 0.0
        %1547 = vmatpush2.xpose.msra.mxu0 0.0
        %1548 = vmatprep.subr.mxu0 0.0
        %1549 = vmatpush2.xpose.msra.mxu0 0.0
        %1550 = vmatprep.subr.mxu0 0.0
        %1551 = vmatpush2.xpose.msra.mxu0 0.0
        %1552 = vmatprep.subr.mxu0 0.0
        %1553 = vmatpush2.xpose.msra.mxu0 0.0
        %1554 = vmatprep.subr.mxu0 0.0
        %1555 = vmatpush2.xpose.msra.mxu0 0.0
        %1556 = vmatprep.subr.mxu0 0.0
        %1557 = vmatpush2.xpose.msra.mxu0 0.0
        %1558 = vmatprep.subr.mxu0 0.0
        %1559 = vmatpush2.xpose.msra.mxu0 0.0
        %1560 = vmatprep.subr.mxu0 0.0
        %1561 = vmatpush2.xpose.msra.mxu0 0.0
        %1562 = vmatprep.subr.mxu0 0.0
        %1563 = vmatpush2.xpose.msra.mxu0 0.0
        %1564 = vmatprep.mubr.f32.mxu0 0.0
        %1565 = vmatmul.mubr.f32.gmra.mxu0 %v1496
        %v1566 = vpop.f32.mrf.mxu0
        %v1567 = vadd.f32 %v998, %v1566
        %v1568 = vpop.f32.mrf.mxu0
        %1569 = vdwg.mxu0
        %v1570 = vsel %vm1076, %v1567, -inf
        %1571 = vmax.xlane.f32.xlu0 %v1570
        %v1572 = vpop.xlane.xlu0 %1571
        %v1573 = vsub.f32 %v1567, %v1572
        %v1574 = vmul.f32 %v1573, 1.442695
        %v1575 = vpow.pop %v1574
        %v1576 = vsel %vm1076, %v1575, 0.0
        %1577 = vadd.xlane.f32.xlu0 %v1576
        %v1578 = vpop.xlane.xlu0 %1577
        %v1579 = vrcp.pop %v1578
        %v1580 = vmul.f32 %v1575, %v1579
        %1581 = vrot.lane.b32.xlu0 %v993, 32
        %v1582 = vpop.permute.xlu0 %1581
        %v1585 = vsel %vm1076, %v1580, 0
        %1587 = vmatprep.subr.mxu0 0.0
        %1588 = vmatpush1.msra.mxu0 0.0
        %1589 = vmatprep.subr.mxu0 0.0
        %1590 = vmatpush1.msra.mxu0 0.0
        %1591 = vmatprep.subr.mxu0 0.0
        %1592 = vmatpush1.msra.mxu0 0.0
        %1593 = vmatprep.subr.mxu0 0.0
        %1594 = vmatpush1.msra.mxu0 0.0
        %1595 = vmatprep.subr.mxu0 0.0
        %1596 = vmatpush1.msra.mxu0 0.0
        %1597 = vmatprep.subr.mxu0 0.0
        %1598 = vmatpush1.msra.mxu0 0.0
        %1599 = vmatprep.subr.mxu0 0.0
        %1600 = vmatpush1.msra.mxu0 0.0
        %1601 = vmatprep.subr.mxu0 0.0
        %1602 = vmatpush1.msra.mxu0 0.0
        %1603 = vmatprep.subr.mxu0 0.0
        %1604 = vmatpush1.msra.mxu0 0.0
        %1605 = vmatprep.subr.mxu0 0.0
        %1606 = vmatpush1.msra.mxu0 0.0
        %1607 = vmatprep.subr.mxu0 0.0
        %1608 = vmatpush1.msra.mxu0 0.0
        %1609 = vmatprep.subr.mxu0 0.0
        %1610 = vmatpush1.msra.mxu0 0.0
        %1611 = vmatprep.subr.mxu0 0.0
        %1612 = vmatpush1.msra.mxu0 0.0
        %1613 = vmatprep.subr.mxu0 0.0
        %1614 = vmatpush1.msra.mxu0 0.0
        %1615 = vmatprep.subr.mxu0 0.0
        %1616 = vmatpush1.msra.mxu0 0.0
        %1617 = vmatprep.subr.mxu0 0.0
        %1618 = vmatpush1.msra.mxu0 %v1582
        %1619 = vmatprep.subr.mxu0 0.0
        %1620 = vmatpush2.msra.mxu0 0.0
        %1621 = vmatprep.subr.mxu0 0.0
        %1622 = vmatpush2.msra.mxu0 0.0
        %1623 = vmatprep.subr.mxu0 0.0
        %1624 = vmatpush2.msra.mxu0 0.0
        %1625 = vmatprep.subr.mxu0 0.0
        %1626 = vmatpush2.msra.mxu0 0.0
        %1627 = vmatprep.subr.mxu0 0.0
        %1628 = vmatpush2.msra.mxu0 0.0
        %1629 = vmatprep.subr.mxu0 0.0
        %1630 = vmatpush2.msra.mxu0 0.0
        %1631 = vmatprep.subr.mxu0 0.0
        %1632 = vmatpush2.msra.mxu0 0.0
        %1633 = vmatprep.subr.mxu0 0.0
        %1634 = vmatpush2.msra.mxu0 0.0
        %1635 = vmatprep.subr.mxu0 0.0
        %1636 = vmatpush2.msra.mxu0 0.0
        %1637 = vmatprep.subr.mxu0 0.0
        %1638 = vmatpush2.msra.mxu0 0.0
        %1639 = vmatprep.subr.mxu0 0.0
        %1640 = vmatpush2.msra.mxu0 0.0
        %1641 = vmatprep.subr.mxu0 0.0
        %1642 = vmatpush2.msra.mxu0 0.0
        %1643 = vmatprep.subr.mxu0 0.0
        %1644 = vmatpush2.msra.mxu0 0.0
        %1645 = vmatprep.subr.mxu0 0.0
        %1646 = vmatpush2.msra.mxu0 0.0
        %1647 = vmatprep.subr.mxu0 0.0
        %1648 = vmatpush2.msra.mxu0 0.0
        %1649 = vmatprep.subr.mxu0 0.0
        %1650 = vmatpush2.msra.mxu0 0.0
        %1651 = vmatprep.mubr.f32.mxu0 0.0
        %1652 = vmatmul.mubr.f32.gmra.mxu0 %v1585
        %v1653 = vpop.f32.mrf.mxu0
        %v1654 = vadd.f32 0.0, %v1653
        %v1655 = vpop.f32.mrf.mxu0
        %1656 = vdwg.mxu0
        %1658 = vrot.lane.b32.xlu0 %v1324, 32
        %v1659 = vpop.permute.xlu0 %1658
        %1662 = vrot.lane.b32.xlu0 %v1489, 64
        %v1663 = vpop.permute.xlu0 %1662
        %1666 = vrot.lane.b32.xlu0 %v1654, 96
        %v1667 = vpop.permute.xlu0 %1666
        %v1669 = vsel %vm999, %v1158, %v1659
        %vm1670 = vcmask 523264
        %v1671 = vsel %vm1670, %v1669, %v1663
        %vm1672 = vcmask 785408
        %v1673 = vsel %vm1672, %v1671, %v1667
        %v1674 = vld [vmem:[#allocation11] sm:$0xff]
        %v1675 = vld [vmem:[#allocation11 + $0x8] sm:$0xff]
        %v1676 = vld [vmem:[#allocation11 + $0x10] sm:$0xff]
        %v1677 = vld [vmem:[#allocation11 + $0x18] sm:$0xff]
        %v1678 = vld [vmem:[#allocation11 + $0x20] sm:$0xff]
        %v1679 = vld [vmem:[#allocation11 + $0x28] sm:$0xff]
        %v1680 = vld [vmem:[#allocation11 + $0x30] sm:$0xff]
        %v1681 = vld [vmem:[#allocation11 + $0x38] sm:$0xff]
        %v1682 = vld [vmem:[#allocation11 + $0x40] sm:$0xff]
        %v1683 = vld [vmem:[#allocation11 + $0x48] sm:$0xff]
        %v1684 = vld [vmem:[#allocation11 + $0x50] sm:$0xff]
        %v1685 = vld [vmem:[#allocation11 + $0x58] sm:$0xff]
        %v1686 = vld [vmem:[#allocation11 + $0x60] sm:$0xff]
        %v1687 = vld [vmem:[#allocation11 + $0x68] sm:$0xff]
        %v1688 = vld [vmem:[#allocation11 + $0x70] sm:$0xff]
        %v1689 = vld [vmem:[#allocation11 + $0x78] sm:$0xff]
        %v1690 = vld [vmem:[%s9] sm:$0x1]
        %v1692 = vlaneseq
        %v1693 = vshrl.u32 %v1692, 7
        %v1694 = vsub.s32 0, %v1693
        %v1695 = vrot.slane %v1690, %v1694
        %1697 = vmatprep.subr.mxu0 0.0
        %1698 = vmatpush1.msra.mxu0 %v1689
        %1699 = vmatprep.subr.mxu0 0.0
        %1700 = vmatpush1.msra.mxu0 %v1688
        %1701 = vmatprep.subr.mxu0 0.0
        %1702 = vmatpush1.msra.mxu0 %v1687
        %1703 = vmatprep.subr.mxu0 0.0
        %1704 = vmatpush1.msra.mxu0 %v1686
        %1705 = vmatprep.subr.mxu0 0.0
        %1706 = vmatpush1.msra.mxu0 %v1685
        %1707 = vmatprep.subr.mxu0 0.0
        %1708 = vmatpush1.msra.mxu0 %v1684
        %1709 = vmatprep.subr.mxu0 0.0
        %1710 = vmatpush1.msra.mxu0 %v1683
        %1711 = vmatprep.subr.mxu0 0.0
        %1712 = vmatpush1.msra.mxu0 %v1682
        %1713 = vmatprep.subr.mxu0 0.0
        %1714 = vmatpush1.msra.mxu0 %v1681
        %1715 = vmatprep.subr.mxu0 0.0
        %1716 = vmatpush1.msra.mxu0 %v1680
        %1717 = vmatprep.subr.mxu0 0.0
        %1718 = vmatpush1.msra.mxu0 %v1679
        %1719 = vmatprep.subr.mxu0 0.0
        %1720 = vmatpush1.msra.mxu0 %v1678
        %1721 = vmatprep.subr.mxu0 0.0
        %1722 = vmatpush1.msra.mxu0 %v1677
        %1723 = vmatprep.subr.mxu0 0.0
        %1724 = vmatpush1.msra.mxu0 %v1676
        %1725 = vmatprep.subr.mxu0 0.0
        %1726 = vmatpush1.msra.mxu0 %v1675
        %1727 = vmatprep.subr.mxu0 0.0
        %1728 = vmatpush1.msra.mxu0 %v1674
        %1729 = vmatprep.subr.mxu0 0.0
        %1730 = vmatpush2.msra.mxu0 0.0
        %1731 = vmatprep.subr.mxu0 0.0
        %1732 = vmatpush2.msra.mxu0 0.0
        %1733 = vmatprep.subr.mxu0 0.0
        %1734 = vmatpush2.msra.mxu0 0.0
        %1735 = vmatprep.subr.mxu0 0.0
        %1736 = vmatpush2.msra.mxu0 0.0
        %1737 = vmatprep.subr.mxu0 0.0
        %1738 = vmatpush2.msra.mxu0 0.0
        %1739 = vmatprep.subr.mxu0 0.0
        %1740 = vmatpush2.msra.mxu0 0.0
        %1741 = vmatprep.subr.mxu0 0.0
        %1742 = vmatpush2.msra.mxu0 0.0
        %1743 = vmatprep.subr.mxu0 0.0
        %1744 = vmatpush2.msra.mxu0 0.0
        %1745 = vmatprep.subr.mxu0 0.0
        %1746 = vmatpush2.msra.mxu0 0.0
        %1747 = vmatprep.subr.mxu0 0.0
        %1748 = vmatpush2.msra.mxu0 0.0
        %1749 = vmatprep.subr.mxu0 0.0
        %1750 = vmatpush2.msra.mxu0 0.0
        %1751 = vmatprep.subr.mxu0 0.0
        %1752 = vmatpush2.msra.mxu0 0.0
        %1753 = vmatprep.subr.mxu0 0.0
        %1754 = vmatpush2.msra.mxu0 0.0
        %1755 = vmatprep.subr.mxu0 0.0
        %1756 = vmatpush2.msra.mxu0 0.0
        %1757 = vmatprep.subr.mxu0 0.0
        %1758 = vmatpush2.msra.mxu0 0.0
        %1759 = vmatprep.subr.mxu0 0.0
        %1760 = vmatpush2.msra.mxu0 0.0
        %1761 = vmatprep.mubr.f32.mxu0 0.0
        %1762 = vmatmul.mubr.f32.gmra.mxu0 %v1673
        %v1763 = vpop.f32.mrf.mxu0
        %v1764 = vadd.f32 %v1695, %v1763
        %v1765 = vpop.f32.mrf.mxu0
        %1766 = vdwg.mxu0
        %v1767 = vadd.f32 %v715, %v1764
        %v1768 = vld [vmem:[%s10] sm:$0x1]
        %v1769 = vld [vmem:[%s11] sm:$0x1]
        %1770 = vadd.xlane.f32.xlu0 %v1767
        %v1771 = vpop.xlane.xlu0 %1770
        %v1772 = vrcp.pop 128.0
        %v1773 = vmul.f32 %v1771, %v1772
        %v1774 = vsub.f32 %v1767, %v1773
        %v1775 = vmul.f32 %v1774, %v1774
        %1776 = vadd.xlane.f32.xlu0 %v1775
        %v1777 = vpop.xlane.xlu0 %1776
        %v1778 = vmul.f32 %v1777, %v1772
        %v1779 = vadd.f32 %v1778, 1e-05
        %v1780 = vrsqrt.pop %v1779
        %v1781 = vmul.f32 %v1774, %v1780
        %v1783 = vlaneseq
        %v1784 = vshrl.u32 %v1783, 7
        %v1785 = vsub.s32 0, %v1784
        %v1786 = vrot.slane %v1768, %v1785
        %v1788 = vmul.f32 %v1781, %v1786
        %v1790 = vlaneseq
        %v1791 = vshrl.u32 %v1790, 7
        %v1792 = vsub.s32 0, %v1791
        %v1793 = vrot.slane %v1769, %v1792
        %v1795 = vadd.f32 %v1788, %v1793
        %v1796 = vld [vmem:[#allocation13] sm:$0xff]
        %v1797 = vld [vmem:[#allocation13 + $0x8] sm:$0xff]
        %v1798 = vld [vmem:[#allocation13 + $0x10] sm:$0xff]
        %v1799 = vld [vmem:[#allocation13 + $0x18] sm:$0xff]
        %v1800 = vld [vmem:[#allocation13 + $0x20] sm:$0xff]
        %v1801 = vld [vmem:[#allocation13 + $0x28] sm:$0xff]
        %v1802 = vld [vmem:[#allocation13 + $0x30] sm:$0xff]
        %v1803 = vld [vmem:[#allocation13 + $0x38] sm:$0xff]
        %v1804 = vld [vmem:[#allocation13 + $0x40] sm:$0xff]
        %v1805 = vld [vmem:[#allocation13 + $0x48] sm:$0xff]
        %v1806 = vld [vmem:[#allocation13 + $0x50] sm:$0xff]
        %v1807 = vld [vmem:[#allocation13 + $0x58] sm:$0xff]
        %v1808 = vld [vmem:[#allocation13 + $0x60] sm:$0xff]
        %v1809 = vld [vmem:[#allocation13 + $0x68] sm:$0xff]
        %v1810 = vld [vmem:[#allocation13 + $0x70] sm:$0xff]
        %v1811 = vld [vmem:[#allocation13 + $0x78] sm:$0xff]
        %v1812 = vld [vmem:[#allocation13 + $0x80] sm:$0xff]
        %v1813 = vld [vmem:[#allocation13 + $0x88] sm:$0xff]
        %v1814 = vld [vmem:[#allocation13 + $0x90] sm:$0xff]
        %v1815 = vld [vmem:[#allocation13 + $0x98] sm:$0xff]
        %v1816 = vld [vmem:[#allocation13 + $0xa0] sm:$0xff]
        %v1817 = vld [vmem:[#allocation13 + $0xa8] sm:$0xff]
        %v1818 = vld [vmem:[#allocation13 + $0xb0] sm:$0xff]
        %v1819 = vld [vmem:[#allocation13 + $0xb8] sm:$0xff]
        %v1820 = vld [vmem:[#allocation13 + $0xc0] sm:$0xff]
        %v1821 = vld [vmem:[#allocation13 + $0xc8] sm:$0xff]
        %v1822 = vld [vmem:[#allocation13 + $0xd0] sm:$0xff]
        %v1823 = vld [vmem:[#allocation13 + $0xd8] sm:$0xff]
        %v1824 = vld [vmem:[#allocation13 + $0xe0] sm:$0xff]
        %v1825 = vld [vmem:[#allocation13 + $0xe8] sm:$0xff]
        %v1826 = vld [vmem:[#allocation13 + $0xf0] sm:$0xff]
        %v1827 = vld [vmem:[#allocation13 + $0xf8] sm:$0xff]
        %v1828 = vld [vmem:[%s13] sm:$0x3]
        %v1830 = vlaneseq
        %v1831 = vshrl.u32 %v1830, 7
        %v1832 = vsub.s32 0, %v1831
        %v1833 = vrot.slane %v1828, %v1832
        %v1834 = vlaneseq
        %v1835 = vshrl.u32 %v1834, 7
        %v1836 = vsub.s32 1, %v1835
        %v1837 = vrot.slane %v1828, %v1836
        %1840 = vmatprep.subr.mxu0 %v1827
        %1841 = vmatpush1.msra.mxu0 %v1826
        %1842 = vmatprep.subr.mxu0 %v1825
        %1843 = vmatpush1.msra.mxu0 %v1824
        %1844 = vmatprep.subr.mxu0 %v1823
        %1845 = vmatpush1.msra.mxu0 %v1822
        %1846 = vmatprep.subr.mxu0 %v1821
        %1847 = vmatpush1.msra.mxu0 %v1820
        %1848 = vmatprep.subr.mxu0 %v1819
        %1849 = vmatpush1.msra.mxu0 %v1818
        %1850 = vmatprep.subr.mxu0 %v1817
        %1851 = vmatpush1.msra.mxu0 %v1816
        %1852 = vmatprep.subr.mxu0 %v1815
        %1853 = vmatpush1.msra.mxu0 %v1814
        %1854 = vmatprep.subr.mxu0 %v1813
        %1855 = vmatpush1.msra.mxu0 %v1812
        %1856 = vmatprep.subr.mxu0 %v1811
        %1857 = vmatpush1.msra.mxu0 %v1810
        %1858 = vmatprep.subr.mxu0 %v1809
        %1859 = vmatpush1.msra.mxu0 %v1808
        %1860 = vmatprep.subr.mxu0 %v1807
        %1861 = vmatpush1.msra.mxu0 %v1806
        %1862 = vmatprep.subr.mxu0 %v1805
        %1863 = vmatpush1.msra.mxu0 %v1804
        %1864 = vmatprep.subr.mxu0 %v1803
        %1865 = vmatpush1.msra.mxu0 %v1802
        %1866 = vmatprep.subr.mxu0 %v1801
        %1867 = vmatpush1.msra.mxu0 %v1800
        %1868 = vmatprep.subr.mxu0 %v1799
        %1869 = vmatpush1.msra.mxu0 %v1798
        %1870 = vmatprep.subr.mxu0 %v1797
        %1871 = vmatpush1.msra.mxu0 %v1796
        %1872 = vmatprep.subr.mxu0 0.0
        %1873 = vmatpush2.msra.mxu0 0.0
        %1874 = vmatprep.subr.mxu0 0.0
        %1875 = vmatpush2.msra.mxu0 0.0
        %1876 = vmatprep.subr.mxu0 0.0
        %1877 = vmatpush2.msra.mxu0 0.0
        %1878 = vmatprep.subr.mxu0 0.0
        %1879 = vmatpush2.msra.mxu0 0.0
        %1880 = vmatprep.subr.mxu0 0.0
        %1881 = vmatpush2.msra.mxu0 0.0
        %1882 = vmatprep.subr.mxu0 0.0
        %1883 = vmatpush2.msra.mxu0 0.0
        %1884 = vmatprep.subr.mxu0 0.0
        %1885 = vmatpush2.msra.mxu0 0.0
        %1886 = vmatprep.subr.mxu0 0.0
        %1887 = vmatpush2.msra.mxu0 0.0
        %1888 = vmatprep.subr.mxu0 0.0
        %1889 = vmatpush2.msra.mxu0 0.0
        %1890 = vmatprep.subr.mxu0 0.0
        %1891 = vmatpush2.msra.mxu0 0.0
        %1892 = vmatprep.subr.mxu0 0.0
        %1893 = vmatpush2.msra.mxu0 0.0
        %1894 = vmatprep.subr.mxu0 0.0
        %1895 = vmatpush2.msra.mxu0 0.0
        %1896 = vmatprep.subr.mxu0 0.0
        %1897 = vmatpush2.msra.mxu0 0.0
        %1898 = vmatprep.subr.mxu0 0.0
        %1899 = vmatpush2.msra.mxu0 0.0
        %1900 = vmatprep.subr.mxu0 0.0
        %1901 = vmatpush2.msra.mxu0 0.0
        %1902 = vmatprep.subr.mxu0 0.0
        %1903 = vmatpush2.msra.mxu0 0.0
        %1904 = vmatprep.mubr.f32.mxu0 0.0
        %1905 = vmatmul.mubr.f32.gmra.mxu0 %v1795
        %v1906 = vpop.f32.mrf.mxu0
        %v1907 = vadd.f32 %v1833, %v1906
        %v1908 = vpop.f32.mrf.mxu0
        %v1909 = vadd.f32 %v1837, %v1908
        %1910 = vdwg.mxu0
        %v1911 = vmax.f32 %v1907, 0.0
        %v1912 = vmax.f32 %v1909, 0.0
        %v1913 = vld [vmem:[#allocation14] sm:$0xff]
        %v1914 = vld [vmem:[#allocation14 + $0x8] sm:$0xff]
        %v1915 = vld [vmem:[#allocation14 + $0x10] sm:$0xff]
        %v1916 = vld [vmem:[#allocation14 + $0x18] sm:$0xff]
        %v1917 = vld [vmem:[#allocation14 + $0x20] sm:$0xff]
        %v1918 = vld [vmem:[#allocation14 + $0x28] sm:$0xff]
        %v1919 = vld [vmem:[#allocation14 + $0x30] sm:$0xff]
        %v1920 = vld [vmem:[#allocation14 + $0x38] sm:$0xff]
        %v1921 = vld [vmem:[#allocation14 + $0x40] sm:$0xff]
        %v1922 = vld [vmem:[#allocation14 + $0x48] sm:$0xff]
        %v1923 = vld [vmem:[#allocation14 + $0x50] sm:$0xff]
        %v1924 = vld [vmem:[#allocation14 + $0x58] sm:$0xff]
        %v1925 = vld [vmem:[#allocation14 + $0x60] sm:$0xff]
        %v1926 = vld [vmem:[#allocation14 + $0x68] sm:$0xff]
        %v1927 = vld [vmem:[#allocation14 + $0x70] sm:$0xff]
        %v1928 = vld [vmem:[#allocation14 + $0x78] sm:$0xff]
        %v1929 = vld [vmem:[#allocation14 + $0x80] sm:$0xff]
        %v1930 = vld [vmem:[#allocation14 + $0x88] sm:$0xff]
        %v1931 = vld [vmem:[#allocation14 + $0x90] sm:$0xff]
        %v1932 = vld [vmem:[#allocation14 + $0x98] sm:$0xff]
        %v1933 = vld [vmem:[#allocation14 + $0xa0] sm:$0xff]
        %v1934 = vld [vmem:[#allocation14 + $0xa8] sm:$0xff]
        %v1935 = vld [vmem:[#allocation14 + $0xb0] sm:$0xff]
        %v1936 = vld [vmem:[#allocation14 + $0xb8] sm:$0xff]
        %v1937 = vld [vmem:[#allocation14 + $0xc0] sm:$0xff]
        %v1938 = vld [vmem:[#allocation14 + $0xc8] sm:$0xff]
        %v1939 = vld [vmem:[#allocation14 + $0xd0] sm:$0xff]
        %v1940 = vld [vmem:[#allocation14 + $0xd8] sm:$0xff]
        %v1941 = vld [vmem:[#allocation14 + $0xe0] sm:$0xff]
        %v1942 = vld [vmem:[#allocation14 + $0xe8] sm:$0xff]
        %v1943 = vld [vmem:[#allocation14 + $0xf0] sm:$0xff]
        %v1944 = vld [vmem:[#allocation14 + $0xf8] sm:$0xff]
        %v1945 = vld [vmem:[%s15] sm:$0x1]
        %v1947 = vlaneseq
        %v1948 = vshrl.u32 %v1947, 7
        %v1949 = vsub.s32 0, %v1948
        %v1950 = vrot.slane %v1945, %v1949
        %1952 = vmatprep.subr.mxu0 0.0
        %1953 = vmatpush1.msra.mxu0 %v1928
        %1954 = vmatprep.subr.mxu0 0.0
        %1955 = vmatpush1.msra.mxu0 %v1927
        %1956 = vmatprep.subr.mxu0 0.0
        %1957 = vmatpush1.msra.mxu0 %v1926
        %1958 = vmatprep.subr.mxu0 0.0
        %1959 = vmatpush1.msra.mxu0 %v1925
        %1960 = vmatprep.subr.mxu0 0.0
        %1961 = vmatpush1.msra.mxu0 %v1924
        %1962 = vmatprep.subr.mxu0 0.0
        %1963 = vmatpush1.msra.mxu0 %v1923
        %1964 = vmatprep.subr.mxu0 0.0
        %1965 = vmatpush1.msra.mxu0 %v1922
        %1966 = vmatprep.subr.mxu0 0.0
        %1967 = vmatpush1.msra.mxu0 %v1921
        %1968 = vmatprep.subr.mxu0 0.0
        %1969 = vmatpush1.msra.mxu0 %v1920
        %1970 = vmatprep.subr.mxu0 0.0
        %1971 = vmatpush1.msra.mxu0 %v1919
        %1972 = vmatprep.subr.mxu0 0.0
        %1973 = vmatpush1.msra.mxu0 %v1918
        %1974 = vmatprep.subr.mxu0 0.0
        %1975 = vmatpush1.msra.mxu0 %v1917
        %1976 = vmatprep.subr.mxu0 0.0
        %1977 = vmatpush1.msra.mxu0 %v1916
        %1978 = vmatprep.subr.mxu0 0.0
        %1979 = vmatpush1.msra.mxu0 %v1915
        %1980 = vmatprep.subr.mxu0 0.0
        %1981 = vmatpush1.msra.mxu0 %v1914
        %1982 = vmatprep.subr.mxu0 0.0
        %1983 = vmatpush1.msra.mxu0 %v1913
        %1984 = vmatprep.subr.mxu0 0.0
        %1985 = vmatpush2.msra.mxu0 %v1944
        %1986 = vmatprep.subr.mxu0 0.0
        %1987 = vmatpush2.msra.mxu0 %v1943
        %1988 = vmatprep.subr.mxu0 0.0
        %1989 = vmatpush2.msra.mxu0 %v1942
        %1990 = vmatprep.subr.mxu0 0.0
        %1991 = vmatpush2.msra.mxu0 %v1941
        %1992 = vmatprep.subr.mxu0 0.0
        %1993 = vmatpush2.msra.mxu0 %v1940
        %1994 = vmatprep.subr.mxu0 0.0
        %1995 = vmatpush2.msra.mxu0 %v1939
        %1996 = vmatprep.subr.mxu0 0.0
        %1997 = vmatpush2.msra.mxu0 %v1938
        %1998 = vmatprep.subr.mxu0 0.0
        %1999 = vmatpush2.msra.mxu0 %v1937
        %2000 = vmatprep.subr.mxu0 0.0
        %2001 = vmatpush2.msra.mxu0 %v1936
        %2002 = vmatprep.subr.mxu0 0.0
        %2003 = vmatpush2.msra.mxu0 %v1935
        %2004 = vmatprep.subr.mxu0 0.0
        %2005 = vmatpush2.msra.mxu0 %v1934
        %2006 = vmatprep.subr.mxu0 0.0
        %2007 = vmatpush2.msra.mxu0 %v1933
        %2008 = vmatprep.subr.mxu0 0.0
        %2009 = vmatpush2.msra.mxu0 %v1932
        %2010 = vmatprep.subr.mxu0 0.0
        %2011 = vmatpush2.msra.mxu0 %v1931
        %2012 = vmatprep.subr.mxu0 0.0
        %2013 = vmatpush2.msra.mxu0 %v1930
        %2014 = vmatprep.subr.mxu0 0.0
        %2015 = vmatpush2.msra.mxu0 %v1929
        %2016 = vmatprep.mubr.f32.mxu0 %v1912
        %2017 = vmatmul.mubr.f32.gmra.mxu0 %v1911
        %v2018 = vpop.f32.mrf.mxu0
        %v2019 = vadd.f32 %v1950, %v2018
        %v2020 = vpop.f32.mrf.mxu0
        %2021 = vdwg.mxu0
        %v2022 = vadd.f32 %v1795, %v2019
        %v2023 = vld [vmem:[%s16] sm:$0x1]
        %v2024 = vld [vmem:[%s17] sm:$0x1]
        %2025 = vadd.xlane.f32.xlu0 %v2022
        %v2026 = vpop.xlane.xlu0 %2025
        %v2027 = vmul.f32 %v2026, %v1772
        %v2028 = vsub.f32 %v2022, %v2027
        %v2029 = vmul.f32 %v2028, %v2028
        %2030 = vadd.xlane.f32.xlu0 %v2029
        %v2031 = vpop.xlane.xlu0 %2030
        %v2032 = vmul.f32 %v2031, %v1772
        %v2033 = vadd.f32 %v2032, 1e-05
        %v2034 = vrsqrt.pop %v2033
        %v2035 = vmul.f32 %v2028, %v2034
        %v2037 = vlaneseq
        %v2038 = vshrl.u32 %v2037, 7
        %v2039 = vsub.s32 0, %v2038
        %v2040 = vrot.slane %v2023, %v2039
        %v2042 = vmul.f32 %v2035, %v2040
        %v2044 = vlaneseq
        %v2045 = vshrl.u32 %v2044, 7
        %v2046 = vsub.s32 0, %v2045
        %v2047 = vrot.slane %v2024, %v2046
        %v2049 = vadd.f32 %v2042, %v2047
        %2050 = vst [vmem:[%s714] sm:$0xff] %v2049
        %s2051 = sand.u32 %s437, 1
        %s2052 = scalar_lea.sflag [#allocation4], %s2051
        %s2053 = sand.u32 %s437, 1
        %s2054 = smul.addr %s2053, 8
        %s2055 = scalar_lea.vmem [#allocation16], %s2054
        // Predicated region
        $region125: #{tpu_custom_call.1} parent=91 // pred_check
          %p2056 = pneg %p447
        $region126: #{tpu_custom_call.1} parent=91 // pred_check_branch
          %2058 = sbr.rel (%p2056) target = $region128
        $region127: #{tpu_custom_call.1} parent=91 // pred_region
          %s2060 = ssub.s32 128, 128
          %2061 = vsyncadd %s2052, %s2060
          %s2062 = smul.addr %s41, 128
          %s2063 = scalar_lea.hbm %s18, %s2062
          %s2065 = sshll.u32 %s2055, 4
          %s2066 = int_to_ptr.vmem [resolvable:$true] %s2065
          %2068 = dma.vmem_to_hbm [thread:$0]  %s2066, 128, %s2063, %s2052
        $region128: #{tpu_custom_call.1} parent=91 // pred_fallthru
          _
      $region92: #{tpu_custom_call.1} parent=5 // pred_fallthru
        _
      %p2069 = scmp.le.s32.totalorder 2, %s36
      // Predicated region
      $region129: #{tpu_custom_call.1} parent=5 // pred_check
        %p2070 = pneg %p2069
      $region130: #{tpu_custom_call.1} parent=5 // pred_check_branch
        %2072 = sbr.rel (%p2070) target = $region132
      $region131: #{tpu_custom_call.1} parent=5 // pred_region
        %s2073 = ssub.s32 %s36, 2
        // Predicated region
        $region133: #{tpu_custom_call.1} parent=131 // pred_check
          %p2074 = pneg %p453
        $region134: #{tpu_custom_call.1} parent=131 // pred_check_branch
          %2076 = sbr.rel (%p2074) target = $region136
        $region135: #{tpu_custom_call.1} parent=131 // pred_region
          %s2077 = sand.u32 %s438, 1
          %s2078 = scalar_lea.sflag [#allocation4], %s2077
          %s2079 = sand.u32 %s438, 1
          %s2080 = smul.addr %s2079, 8
          %s2081 = scalar_lea.vmem [#allocation16], %s2080
          %2082 = dma.done %s2078, 128
        $region136: #{tpu_custom_call.1} parent=131 // pred_fallthru
          _
      $region132: #{tpu_custom_call.1} parent=5 // pred_fallthru
        _
    $region6: #{tpu_custom_call.1} parent=1 // loop_footer
      %s40 = sadd.s32 1, %s36
    $region7: #{tpu_custom_call.1} parent=1 // loop_footer_branch
      %35 = sbr.rel target = $region3
    $region8: #{tpu_custom_call.1} parent=1 // loop_exit
      _
    %2083 = vsyncpa [#allocation3], 1
    %s2084 = scalar_lea.sflag [#allocation3], 1
    %2085 = vsyncpa %s2084, 1
    %2086 = vsyncpa [#allocation6], 1
    %s2087 = scalar_lea.sflag [#allocation6], 1
    %2088 = vsyncpa %s2087, 1
    %2089 = vsyncpa [#allocation9], 1
    %2090 = vsyncpa [#allocation12], 1
    %2091 = vsyncpa [#allocation15], 1
    %2092 = vsyncpa [#allocation4], 1
    %s2093 = scalar_lea.sflag [#allocation4], 1
    %2094 = vsyncpa %s2093, 1

</llo_original>
